<compile_context>
chip_gen: v7x
topology: tpu7x:2x2x1
jax: 0.10.0
libtpu: 0.0.40
codegen_flags: <defaults>
</compile_context>

<pallas_src>
import functools
import math

import jax
import jax.numpy as jnp
import numpy as np
from jax import lax
from jax.experimental import pallas as pl
from jax.experimental.pallas import tpu as pltpu

_EPS = 1e-5  # torch GroupNorm default eps


# ---------------------------------------------------------------- in-kernel math
def _erf(x):
    # Abramowitz & Stegun 7.1.26 polynomial (|err| < 1.5e-7); exp + EUP recip only.
    a1, a2, a3, a4, a5 = (0.254829592, -0.284496736, 1.421413741,
                          -1.453152027, 1.061405429)
    pcf = 0.3275911
    s = jnp.where(x >= 0.0, 1.0, -1.0)
    ax = jnp.abs(x)
    d = 1.0 + pcf * ax
    r = pl.reciprocal(d, approx=True)   # EUP slot (effectively free)
    t = r * (2.0 - d * r)               # one Newton step -> ~f32-accurate 1/d
    poly = ((((a5 * t + a4) * t + a3) * t + a2) * t + a1) * t
    return s * (1.0 - poly * jnp.exp(-ax * ax))


def _gelu(x):
    return 0.5 * x * (1.0 + _erf(x * (1.0 / math.sqrt(2.0))))


# ---------------------------------------------------------------- fused kernel
def _down_img_kernel(mask_in_ref, mask_out_ref, x_ref,
                     w1_ref, g1_ref, b1_ref,
                     w2_ref, g2_ref, b2_ref,
                     w3_ref, g3_ref, b3_ref,
                     w4_ref, g4_ref, b4_ref,
                     out_ref, *, tb, h, w):
    """Per grid step: TB samples x (4 x (3x3 conv -> GN(1,C) [-> GELU])) + residual.

    Channel-major: activations are (C, P) tiles with P = h*w on the lane axis.
    """
    p = h * w
    mask_in = mask_in_ref[...]      # (9*Cin,  P) 0/1 tap-validity (SAME zero pad)
    mask_out = mask_out_ref[...]    # (9*Cout, P)

    def im2col(a, mask):
        # (C, P) -> (9*C, P): each 3x3 tap is a static lane roll of the flat
        # image (flat shift dh*W + dw); ONE mask multiply zeroes out-of-image taps.
        taps = []
        for kh in range(3):
            for kw in range(3):
                s = (kh - 1) * w + (kw - 1)
                taps.append(a if s == 0 else pltpu.roll(a, (-s) % p, axis=1))
        return jnp.concatenate(taps, axis=0) * mask

    def conv_gn(a, mask, w_r, g_r, b_r):
        # 3x3 conv (bias=False) as one MXU matmul, fused GroupNorm(1, C).
        z = jnp.dot(w_r[...], im2col(a, mask),
                    preferred_element_type=jnp.float32)            # (Cout, P)
        inv_cnt = 1.0 / (z.shape[0] * z.shape[1])
        mu = jnp.sum(z, axis=(0, 1), keepdims=True) * inv_cnt       # one-pass stats:
        m2 = jnp.sum(z * z, axis=(0, 1), keepdims=True) * inv_cnt   # independent sums
        var = jnp.maximum(m2 - mu * mu, 0.0)
        return (z - mu) * lax.rsqrt(var + _EPS) * g_r[...] + b_r[...]

    for b in range(tb):                 # static unroll over samples in this block
        x0 = x_ref[b]                   # (Cin, P); also the residual source
        # DoubleConv(in, in, residual=True)
        t = _gelu(conv_gn(x0, mask_in, w1_ref, g1_ref, b1_ref))
        t = _gelu(x0 + conv_gn(t, mask_in, w2_ref, g2_ref, b2_ref))
        # DoubleConv(in, out)
        t = _gelu(conv_gn(t, mask_in, w3_ref, g3_ref, b3_ref))
        out_ref[b] = conv_gn(t, mask_out, w4_ref, g4_ref, b4_ref)


# ---------------------------------------------------------------- wrapper (glue)
def _tap_masks(h, w):
    """(9, P) float mask: row t == 1 where 3x3 tap t of each pixel is in-image."""
    r = np.arange(h).reshape(h, 1)
    c = np.arange(w).reshape(1, w)
    rows = []
    for kh in range(3):
        for kw in range(3):
            dh, dw = kh - 1, kw - 1
            ok = (r + dh >= 0) & (r + dh < h) & (c + dw >= 0) & (c + dw < w)
            rows.append(ok.reshape(1, h * w))
    return np.concatenate(rows, axis=0).astype(np.float32)


def _w_mat(wgt):
    # torch (Cout, Cin, KH, KW) -> (Cout, KH, KW, Cin) -> (Cout, 9*Cin);
    # columns are tap-major / channel-minor to match the kernel's im2col concat.
    cout, cin = wgt.shape[0], wgt.shape[1]
    return jnp.transpose(wgt, (0, 2, 3, 1)).reshape(cout, 9 * cin).astype(jnp.float32)


def _pick_tb(n):
    # Largest per-step sample batch that keeps >= 2 grid steps (v7x: 2 TCs).
    best = 1
    for tb in range(1, n + 1):
        if n % tb == 0 and n // tb >= 2:
            best = tb
    return best


def down_img_forward(x_nchw, params, tb=None):
    x = x_nchw.astype(jnp.float32)
    n, cin, h, w = x.shape
    h2, w2 = h // 2, w // 2
    p = h2 * w2
    cout = params["w4"].shape[0]
    if tb is None:
        tb = _pick_tb(n)

    # MaxPool2d(2) in NCHW (reshape+max; XLA fuses it — no transpose pass).
    # TODO(synk): fold the 2x2 pool into the kernel to drop this HBM round trip.
    pooled = x.reshape(n, cin, h2, 2, w2, 2).max(axis=(3, 5)).reshape(n, cin, p)

    mask9 = _tap_masks(h2, w2)                                    # (9, P)
    mask_in = jnp.asarray(np.repeat(mask9, cin, axis=0))          # (9*cin, P)
    mask_out = jnp.asarray(np.repeat(mask9, cout, axis=0))        # (9*cout, P)

    w1m, w2m = _w_mat(params["w1"]), _w_mat(params["w2"])
    w3m, w4m = _w_mat(params["w3"]), _w_mat(params["w4"])
    col = lambda v: v.reshape(-1, 1).astype(jnp.float32)          # (C, 1) per-channel
    g1, b1 = col(params["g1"]), col(params["b1"])
    g2, b2 = col(params["g2"]), col(params["b2"])
    g3, b3 = col(params["g3"]), col(params["b3"])
    g4, b4 = col(params["g4"]), col(params["b4"])

    rep = lambda i: (0, 0)   # weights / norm params / masks: resident, never re-fetched
    kernel = functools.partial(_down_img_kernel, tb=tb, h=h2, w=w2)

    out = pl.pallas_call(
        kernel,
        out_shape=jax.ShapeDtypeStruct((n, cout, p), jnp.float32),
        grid=(n // tb,),
        in_specs=[
            pl.BlockSpec((9 * cin, p), rep),                      # tap mask (Cin stages)
            pl.BlockSpec((9 * cout, p), rep),                     # tap mask (Cout stage)
            pl.BlockSpec((tb, cin, p), lambda i: (i, 0, 0)),      # pooled samples (NCHW flat)
            pl.BlockSpec((cin, 9 * cin), rep),                    # w1^T
            pl.BlockSpec((cin, 1), rep), pl.BlockSpec((cin, 1), rep),
            pl.BlockSpec((cin, 9 * cin), rep),                    # w2^T
            pl.BlockSpec((cin, 1), rep), pl.BlockSpec((cin, 1), rep),
            pl.BlockSpec((cout, 9 * cin), rep),                   # w3^T
            pl.BlockSpec((cout, 1), rep), pl.BlockSpec((cout, 1), rep),
            pl.BlockSpec((cout, 9 * cout), rep),                  # w4^T
            pl.BlockSpec((cout, 1), rep), pl.BlockSpec((cout, 1), rep),
        ],
        out_specs=pl.BlockSpec((tb, cout, p), lambda i: (i, 0, 0)),
        compiler_params=pltpu.CompilerParams(
            dimension_semantics=("parallel",),     # shards batch over v7x's 2 TCs
            vmem_limit_bytes=48 * 1024 * 1024),    # safe on v7x (64 MiB phys); plenty here
    )(mask_in, mask_out, pooled,
      w1m, g1, b1, w2m, g2, b2, w3m, g3, b3, w4m, g4, b4)

    return out.reshape(n, cout, h2, w2)            # already NCHW — no transpose


# ---------------------------------------------------------------- pure-JAX reference
def _ref_forward(x_nchw, params):
    x = x_nchw.astype(jnp.float32)
    n, c, h, w = x.shape
    pooled = x.reshape(n, c, h // 2, 2, w // 2, 2).max(axis=(3, 5))

    def conv(v, wgt):
        return lax.conv_general_dilated(
            v, wgt.astype(jnp.float32), (1, 1), "SAME",
            dimension_numbers=("NCHW", "OIHW", "NCHW"),
            precision=lax.Precision.HIGHEST)

    def gn(v, g, b):
        mu = jnp.mean(v, axis=(1, 2, 3), keepdims=True)
        var = jnp.mean((v - mu) ** 2, axis=(1, 2, 3), keepdims=True)
        return ((v - mu) * lax.rsqrt(var + _EPS)
                * g.reshape(1, -1, 1, 1) + b.reshape(1, -1, 1, 1))

    gelu = lambda v: jax.nn.gelu(v, approximate=False)

    t = gelu(gn(conv(pooled, params["w1"]), params["g1"], params["b1"]))
    t = gn(conv(t, params["w2"]), params["g2"], params["b2"])
    y1 = gelu(pooled + t)
    t = gelu(gn(conv(y1, params["w3"]), params["g3"], params["b3"]))
    y2 = gn(conv(t, params["w4"]), params["g4"], params["b4"])
    return y2


# ---------------------------------------------------------------- main
if __name__ == "__main__":
    N, C_IN, C_OUT, H, W = 2, 4, 8, 16, 16
    key = jax.random.PRNGKey(0)
    kx, k1, k2, k3, k4, kg, kb = jax.random.split(key, 7)
    x = jax.random.normal(kx, (N, C_IN, H, W), dtype=jnp.float32)

    def winit(k, shape):
        return 0.2 * jax.random.normal(k, shape, dtype=jnp.float32)

    gkeys = jax.random.split(kg, 4)
    bkeys = jax.random.split(kb, 4)
    params = {
        "w1": winit(k1, (C_IN, C_IN, 3, 3)),
        "w2": winit(k2, (C_IN, C_IN, 3, 3)),
        "w3": winit(k3, (C_OUT, C_IN, 3, 3)),
        "w4": winit(k4, (C_OUT, C_OUT, 3, 3)),
        "g1": 1.0 + 0.1 * jax.random.normal(gkeys[0], (C_IN,), jnp.float32),
        "g2": 1.0 + 0.1 * jax.random.normal(gkeys[1], (C_IN,), jnp.float32),
        "g3": 1.0 + 0.1 * jax.random.normal(gkeys[2], (C_OUT,), jnp.float32),
        "g4": 1.0 + 0.1 * jax.random.normal(gkeys[3], (C_OUT,), jnp.float32),
        "b1": 0.1 * jax.random.normal(bkeys[0], (C_IN,), jnp.float32),
        "b2": 0.1 * jax.random.normal(bkeys[1], (C_IN,), jnp.float32),
        "b3": 0.1 * jax.random.normal(bkeys[2], (C_OUT,), jnp.float32),
        "b4": 0.1 * jax.random.normal(bkeys[3], (C_OUT,), jnp.float32),
    }

    out = jax.jit(down_img_forward)(x, params)
    out = jax.block_until_ready(out)
    assert out.shape == (N, C_OUT, H // 2, W // 2), out.shape

    ref = _ref_forward(x, params)
    np.testing.assert_allclose(np.asarray(out), np.asarray(ref),
                               rtol=2e-3, atol=2e-3)
    print("KERNEL_OK")
</pallas_src>

<mosaic_0001>
module attributes {stable_mosaic.version = 11 : i64} {
  func.func @_down_img_kernel(%arg0: i32, %arg1: memref<36x64xf32, #tpu.memory_space<vmem>>, %arg2: memref<72x64xf32, #tpu.memory_space<vmem>>, %arg3: memref<1x4x64xf32, #tpu.memory_space<vmem>>, %arg4: memref<4x36xf32, #tpu.memory_space<vmem>>, %arg5: memref<4x1xf32, #tpu.memory_space<vmem>>, %arg6: memref<4x1xf32, #tpu.memory_space<vmem>>, %arg7: memref<4x36xf32, #tpu.memory_space<vmem>>, %arg8: memref<4x1xf32, #tpu.memory_space<vmem>>, %arg9: memref<4x1xf32, #tpu.memory_space<vmem>>, %arg10: memref<8x36xf32, #tpu.memory_space<vmem>>, %arg11: memref<8x1xf32, #tpu.memory_space<vmem>>, %arg12: memref<8x1xf32, #tpu.memory_space<vmem>>, %arg13: memref<8x72xf32, #tpu.memory_space<vmem>>, %arg14: memref<8x1xf32, #tpu.memory_space<vmem>>, %arg15: memref<8x1xf32, #tpu.memory_space<vmem>>, %arg16: memref<1x8x64xf32, #tpu.memory_space<vmem>>) attributes {dimension_semantics = [#tpu.dimension_semantics<parallel>], iteration_bounds = array<i64: 2>, scalar_prefetch = 0 : i64, scratch_operands = 0 : i64, tpu.core_type = #tpu.core_type<tc>, window_params = [{pipeline_mode = #tpu.pipeline_mode<synchronous>, transform_indices = @transform_0, window_bounds = array<i64: 36, 64>}, {pipeline_mode = #tpu.pipeline_mode<synchronous>, transform_indices = @transform_1, window_bounds = array<i64: 72, 64>}, {transform_indices = @transform_2, window_bounds = array<i64: 1, 4, 64>}, {pipeline_mode = #tpu.pipeline_mode<synchronous>, transform_indices = @transform_3, window_bounds = array<i64: 4, 36>}, {pipeline_mode = #tpu.pipeline_mode<synchronous>, transform_indices = @transform_4, window_bounds = array<i64: 4, 1>}, {pipeline_mode = #tpu.pipeline_mode<synchronous>, transform_indices = @transform_5, window_bounds = array<i64: 4, 1>}, {pipeline_mode = #tpu.pipeline_mode<synchronous>, transform_indices = @transform_6, window_bounds = array<i64: 4, 36>}, {pipeline_mode = #tpu.pipeline_mode<synchronous>, transform_indices = @transform_7, window_bounds = array<i64: 4, 1>}, {pipeline_mode = #tpu.pipeline_mode<synchronous>, transform_indices = @transform_8, window_bounds = array<i64: 4, 1>}, {pipeline_mode = #tpu.pipeline_mode<synchronous>, transform_indices = @transform_9, window_bounds = array<i64: 8, 36>}, {pipeline_mode = #tpu.pipeline_mode<synchronous>, transform_indices = @transform_10, window_bounds = array<i64: 8, 1>}, {pipeline_mode = #tpu.pipeline_mode<synchronous>, transform_indices = @transform_11, window_bounds = array<i64: 8, 1>}, {pipeline_mode = #tpu.pipeline_mode<synchronous>, transform_indices = @transform_12, window_bounds = array<i64: 8, 72>}, {pipeline_mode = #tpu.pipeline_mode<synchronous>, transform_indices = @transform_13, window_bounds = array<i64: 8, 1>}, {pipeline_mode = #tpu.pipeline_mode<synchronous>, transform_indices = @transform_14, window_bounds = array<i64: 8, 1>}, {transform_indices = @transform_15, window_bounds = array<i64: 1, 8, 64>}]} {
    %c0 = arith.constant 0 : index
    %c0_0 = arith.constant 0 : index
    %0 = vector.load %arg1[%c0, %c0_0] : memref<36x64xf32, #tpu.memory_space<vmem>>, vector<36x64xf32>
    %c0_1 = arith.constant 0 : index
    %c0_2 = arith.constant 0 : index
    %1 = vector.load %arg2[%c0_1, %c0_2] : memref<72x64xf32, #tpu.memory_space<vmem>>, vector<72x64xf32>
    %c0_3 = arith.constant 0 : index
    %c0_4 = arith.constant 0 : index
    %c0_5 = arith.constant 0 : index
    %2 = vector.load %arg3[%c0_3, %c0_4, %c0_5] : memref<1x4x64xf32, #tpu.memory_space<vmem>>, vector<1x4x64xf32>
    %3 = vector.shape_cast %2 : vector<1x4x64xf32> to vector<4x64xf32>
    %c0_6 = arith.constant 0 : index
    %c0_7 = arith.constant 0 : index
    %4 = vector.load %arg4[%c0_6, %c0_7] : memref<4x36xf32, #tpu.memory_space<vmem>>, vector<4x36xf32>
    %c9_i32 = arith.constant 9 : i32
    %5 = tpu.dynamic_rotate %3 by %c9_i32 dim 1 : vector<4x64xf32>, i32 -> vector<4x64xf32>
    %c8_i32 = arith.constant 8 : i32
    %6 = tpu.dynamic_rotate %3 by %c8_i32 dim 1 : vector<4x64xf32>, i32 -> vector<4x64xf32>
    %c7_i32 = arith.constant 7 : i32
    %7 = tpu.dynamic_rotate %3 by %c7_i32 dim 1 : vector<4x64xf32>, i32 -> vector<4x64xf32>
    %c1_i32 = arith.constant 1 : i32
    %8 = tpu.dynamic_rotate %3 by %c1_i32 dim 1 : vector<4x64xf32>, i32 -> vector<4x64xf32>
    %c63_i32 = arith.constant 63 : i32
    %9 = tpu.dynamic_rotate %3 by %c63_i32 dim 1 : vector<4x64xf32>, i32 -> vector<4x64xf32>
    %c57_i32 = arith.constant 57 : i32
    %10 = tpu.dynamic_rotate %3 by %c57_i32 dim 1 : vector<4x64xf32>, i32 -> vector<4x64xf32>
    %c56_i32 = arith.constant 56 : i32
    %11 = tpu.dynamic_rotate %3 by %c56_i32 dim 1 : vector<4x64xf32>, i32 -> vector<4x64xf32>
    %c55_i32 = arith.constant 55 : i32
    %12 = tpu.dynamic_rotate %3 by %c55_i32 dim 1 : vector<4x64xf32>, i32 -> vector<4x64xf32>
    %13 = tpu.concatenate %5, %6, %7, %8, %3, %9, %10, %11, %12 in 0 : vector<4x64xf32>, vector<4x64xf32>, vector<4x64xf32>, vector<4x64xf32>, vector<4x64xf32>, vector<4x64xf32>, vector<4x64xf32>, vector<4x64xf32>, vector<4x64xf32> -> vector<36x64xf32>
    %14 = arith.mulf %13, %0 : vector<36x64xf32>
    %cst = arith.constant dense<0.000000e+00> : vector<4x64xf32>
    %15 = tpu.matmul %4, %14, %cst {dimension_numbers = #tpu.dot_dimension_numbers<[1], [0], [0], [1], [0, 0, 1, 1], [], []>} : vector<4x36xf32>, vector<36x64xf32>, vector<4x64xf32> -> vector<4x64xf32>
    %16 = vector.shape_cast %15 : vector<4x64xf32> to vector<1x4x64xf32>
    %cst_8 = arith.constant dense<0.000000e+00> : vector<1xf32>
    %17 = vector.multi_reduction <add>, %16, %cst_8 [1, 2] : vector<1x4x64xf32> to vector<1xf32>
    %18 = vector.shape_cast %17 : vector<1xf32> to vector<1x1x1xf32>
    %19 = vector.extract %18[0, 0, 0] : f32 from vector<1x1x1xf32>
    %20 = vector.broadcast %19 : f32 to vector<1x1xf32>
    %cst_9 = arith.constant 3.906250e-03 : f32
    %21 = vector.broadcast %cst_9 : f32 to vector<1x1xf32>
    %22 = arith.mulf %20, %21 : vector<1x1xf32>
    %23 = arith.mulf %15, %15 : vector<4x64xf32>
    %24 = vector.shape_cast %23 : vector<4x64xf32> to vector<1x4x64xf32>
    %cst_10 = arith.constant dense<0.000000e+00> : vector<1xf32>
    %25 = vector.multi_reduction <add>, %24, %cst_10 [1, 2] : vector<1x4x64xf32> to vector<1xf32>
    %26 = vector.shape_cast %25 : vector<1xf32> to vector<1x1x1xf32>
    %27 = vector.extract %26[0, 0, 0] : f32 from vector<1x1x1xf32>
    %28 = vector.broadcast %27 : f32 to vector<1x1xf32>
    %cst_11 = arith.constant 3.906250e-03 : f32
    %29 = vector.broadcast %cst_11 : f32 to vector<1x1xf32>
    %30 = arith.mulf %28, %29 : vector<1x1xf32>
    %31 = arith.mulf %22, %22 : vector<1x1xf32>
    %32 = arith.subf %30, %31 : vector<1x1xf32>
    %cst_12 = arith.constant 0.000000e+00 : f32
    %33 = vector.broadcast %cst_12 : f32 to vector<1x1xf32>
    %34 = arith.maximumf %32, %33 : vector<1x1xf32>
    %35 = vector.broadcast %22 : vector<1x1xf32> to vector<4x64xf32>
    %36 = arith.subf %15, %35 : vector<4x64xf32>
    %cst_13 = arith.constant 9.99999974E-6 : f32
    %37 = vector.broadcast %cst_13 : f32 to vector<1x1xf32>
    %38 = arith.addf %34, %37 : vector<1x1xf32>
    %39 = math.rsqrt %38 : vector<1x1xf32>
    %40 = vector.broadcast %39 : vector<1x1xf32> to vector<4x64xf32>
    %41 = arith.mulf %36, %40 : vector<4x64xf32>
    %c0_14 = arith.constant 0 : index
    %c0_15 = arith.constant 0 : index
    %42 = vector.load %arg5[%c0_14, %c0_15] : memref<4x1xf32, #tpu.memory_space<vmem>>, vector<4x1xf32>
    %43 = vector.broadcast %42 : vector<4x1xf32> to vector<4x64xf32>
    %44 = arith.mulf %41, %43 : vector<4x64xf32>
    %c0_16 = arith.constant 0 : index
    %c0_17 = arith.constant 0 : index
    %45 = vector.load %arg6[%c0_16, %c0_17] : memref<4x1xf32, #tpu.memory_space<vmem>>, vector<4x1xf32>
    %46 = vector.broadcast %45 : vector<4x1xf32> to vector<4x64xf32>
    %47 = arith.addf %44, %46 : vector<4x64xf32>
    %cst_18 = arith.constant 5.000000e-01 : f32
    %48 = vector.broadcast %cst_18 : f32 to vector<4x64xf32>
    %49 = arith.mulf %48, %47 : vector<4x64xf32>
    %cst_19 = arith.constant 0.707106769 : f32
    %50 = vector.broadcast %cst_19 : f32 to vector<4x64xf32>
    %51 = arith.mulf %47, %50 : vector<4x64xf32>
    %cst_20 = arith.constant 0.000000e+00 : f32
    %52 = vector.broadcast %cst_20 : f32 to vector<4x64xf32>
    %53 = arith.cmpf oge, %51, %52 : vector<4x64xf32>
    %cst_21 = arith.constant 1.000000e+00 : f32
    %cst_22 = arith.constant -1.000000e+00 : f32
    %54 = vector.broadcast %cst_21 : f32 to vector<4x64xf32>
    %55 = vector.broadcast %cst_22 : f32 to vector<4x64xf32>
    %56 = arith.select %53, %54, %55 : vector<4x64xi1>, vector<4x64xf32>
    %57 = math.absf %51 : vector<4x64xf32>
    %cst_23 = arith.constant 0.327591091 : f32
    %58 = vector.broadcast %cst_23 : f32 to vector<4x64xf32>
    %59 = arith.mulf %58, %57 : vector<4x64xf32>
    %cst_24 = arith.constant 1.000000e+00 : f32
    %60 = vector.broadcast %cst_24 : f32 to vector<4x64xf32>
    %61 = arith.addf %60, %59 : vector<4x64xf32>
    %62 = tpu.reciprocal %61 {approx = true} : vector<4x64xf32> -> vector<4x64xf32>
    %63 = arith.mulf %61, %62 : vector<4x64xf32>
    %cst_25 = arith.constant 2.000000e+00 : f32
    %64 = vector.broadcast %cst_25 : f32 to vector<4x64xf32>
    %65 = arith.subf %64, %63 : vector<4x64xf32>
    %66 = arith.mulf %62, %65 : vector<4x64xf32>
    %cst_26 = arith.constant 1.06140542 : f32
    %67 = vector.broadcast %cst_26 : f32 to vector<4x64xf32>
    %68 = arith.mulf %67, %66 : vector<4x64xf32>
    %cst_27 = arith.constant -1.45315206 : f32
    %69 = vector.broadcast %cst_27 : f32 to vector<4x64xf32>
    %70 = arith.addf %68, %69 : vector<4x64xf32>
    %71 = arith.mulf %70, %66 : vector<4x64xf32>
    %cst_28 = arith.constant 1.42141378 : f32
    %72 = vector.broadcast %cst_28 : f32 to vector<4x64xf32>
    %73 = arith.addf %71, %72 : vector<4x64xf32>
    %74 = arith.mulf %73, %66 : vector<4x64xf32>
    %cst_29 = arith.constant -0.284496725 : f32
    %75 = vector.broadcast %cst_29 : f32 to vector<4x64xf32>
    %76 = arith.addf %74, %75 : vector<4x64xf32>
    %77 = arith.mulf %76, %66 : vector<4x64xf32>
    %cst_30 = arith.constant 0.254829586 : f32
    %78 = vector.broadcast %cst_30 : f32 to vector<4x64xf32>
    %79 = arith.addf %77, %78 : vector<4x64xf32>
    %80 = arith.mulf %79, %66 : vector<4x64xf32>
    %cst_31 = arith.constant 0.000000e+00 : f32
    %81 = vector.broadcast %cst_31 : f32 to vector<4x64xf32>
    %82 = arith.subf %81, %57 : vector<4x64xf32>
    %83 = arith.mulf %82, %57 : vector<4x64xf32>
    %84 = math.exp %83 : vector<4x64xf32>
    %85 = arith.mulf %80, %84 : vector<4x64xf32>
    %cst_32 = arith.constant 1.000000e+00 : f32
    %86 = vector.broadcast %cst_32 : f32 to vector<4x64xf32>
    %87 = arith.subf %86, %85 : vector<4x64xf32>
    %88 = arith.mulf %56, %87 : vector<4x64xf32>
    %cst_33 = arith.constant 1.000000e+00 : f32
    %89 = vector.broadcast %cst_33 : f32 to vector<4x64xf32>
    %90 = arith.addf %89, %88 : vector<4x64xf32>
    %91 = arith.mulf %49, %90 : vector<4x64xf32>
    %c0_34 = arith.constant 0 : index
    %c0_35 = arith.constant 0 : index
    %92 = vector.load %arg7[%c0_34, %c0_35] : memref<4x36xf32, #tpu.memory_space<vmem>>, vector<4x36xf32>
    %c9_i32_36 = arith.constant 9 : i32
    %93 = tpu.dynamic_rotate %91 by %c9_i32_36 dim 1 : vector<4x64xf32>, i32 -> vector<4x64xf32>
    %c8_i32_37 = arith.constant 8 : i32
    %94 = tpu.dynamic_rotate %91 by %c8_i32_37 dim 1 : vector<4x64xf32>, i32 -> vector<4x64xf32>
    %c7_i32_38 = arith.constant 7 : i32
    %95 = tpu.dynamic_rotate %91 by %c7_i32_38 dim 1 : vector<4x64xf32>, i32 -> vector<4x64xf32>
    %c1_i32_39 = arith.constant 1 : i32
    %96 = tpu.dynamic_rotate %91 by %c1_i32_39 dim 1 : vector<4x64xf32>, i32 -> vector<4x64xf32>
    %c63_i32_40 = arith.constant 63 : i32
    %97 = tpu.dynamic_rotate %91 by %c63_i32_40 dim 1 : vector<4x64xf32>, i32 -> vector<4x64xf32>
    %c57_i32_41 = arith.constant 57 : i32
    %98 = tpu.dynamic_rotate %91 by %c57_i32_41 dim 1 : vector<4x64xf32>, i32 -> vector<4x64xf32>
    %c56_i32_42 = arith.constant 56 : i32
    %99 = tpu.dynamic_rotate %91 by %c56_i32_42 dim 1 : vector<4x64xf32>, i32 -> vector<4x64xf32>
    %c55_i32_43 = arith.constant 55 : i32
    %100 = tpu.dynamic_rotate %91 by %c55_i32_43 dim 1 : vector<4x64xf32>, i32 -> vector<4x64xf32>
    %101 = tpu.concatenate %93, %94, %95, %96, %91, %97, %98, %99, %100 in 0 : vector<4x64xf32>, vector<4x64xf32>, vector<4x64xf32>, vector<4x64xf32>, vector<4x64xf32>, vector<4x64xf32>, vector<4x64xf32>, vector<4x64xf32>, vector<4x64xf32> -> vector<36x64xf32>
    %102 = arith.mulf %101, %0 : vector<36x64xf32>
    %cst_44 = arith.constant dense<0.000000e+00> : vector<4x64xf32>
    %103 = tpu.matmul %92, %102, %cst_44 {dimension_numbers = #tpu.dot_dimension_numbers<[1], [0], [0], [1], [0, 0, 1, 1], [], []>} : vector<4x36xf32>, vector<36x64xf32>, vector<4x64xf32> -> vector<4x64xf32>
    %104 = vector.shape_cast %103 : vector<4x64xf32> to vector<1x4x64xf32>
    %cst_45 = arith.constant dense<0.000000e+00> : vector<1xf32>
    %105 = vector.multi_reduction <add>, %104, %cst_45 [1, 2] : vector<1x4x64xf32> to vector<1xf32>
    %106 = vector.shape_cast %105 : vector<1xf32> to vector<1x1x1xf32>
    %107 = vector.extract %106[0, 0, 0] : f32 from vector<1x1x1xf32>
    %108 = vector.broadcast %107 : f32 to vector<1x1xf32>
    %cst_46 = arith.constant 3.906250e-03 : f32
    %109 = vector.broadcast %cst_46 : f32 to vector<1x1xf32>
    %110 = arith.mulf %108, %109 : vector<1x1xf32>
    %111 = arith.mulf %103, %103 : vector<4x64xf32>
    %112 = vector.shape_cast %111 : vector<4x64xf32> to vector<1x4x64xf32>
    %cst_47 = arith.constant dense<0.000000e+00> : vector<1xf32>
    %113 = vector.multi_reduction <add>, %112, %cst_47 [1, 2] : vector<1x4x64xf32> to vector<1xf32>
    %114 = vector.shape_cast %113 : vector<1xf32> to vector<1x1x1xf32>
    %115 = vector.extract %114[0, 0, 0] : f32 from vector<1x1x1xf32>
    %116 = vector.broadcast %115 : f32 to vector<1x1xf32>
    %cst_48 = arith.constant 3.906250e-03 : f32
    %117 = vector.broadcast %cst_48 : f32 to vector<1x1xf32>
    %118 = arith.mulf %116, %117 : vector<1x1xf32>
    %119 = arith.mulf %110, %110 : vector<1x1xf32>
    %120 = arith.subf %118, %119 : vector<1x1xf32>
    %cst_49 = arith.constant 0.000000e+00 : f32
    %121 = vector.broadcast %cst_49 : f32 to vector<1x1xf32>
    %122 = arith.maximumf %120, %121 : vector<1x1xf32>
    %123 = vector.broadcast %110 : vector<1x1xf32> to vector<4x64xf32>
    %124 = arith.subf %103, %123 : vector<4x64xf32>
    %cst_50 = arith.constant 9.99999974E-6 : f32
    %125 = vector.broadcast %cst_50 : f32 to vector<1x1xf32>
    %126 = arith.addf %122, %125 : vector<1x1xf32>
    %127 = math.rsqrt %126 : vector<1x1xf32>
    %128 = vector.broadcast %127 : vector<1x1xf32> to vector<4x64xf32>
    %129 = arith.mulf %124, %128 : vector<4x64xf32>
    %c0_51 = arith.constant 0 : index
    %c0_52 = arith.constant 0 : index
    %130 = vector.load %arg8[%c0_51, %c0_52] : memref<4x1xf32, #tpu.memory_space<vmem>>, vector<4x1xf32>
    %131 = vector.broadcast %130 : vector<4x1xf32> to vector<4x64xf32>
    %132 = arith.mulf %129, %131 : vector<4x64xf32>
    %c0_53 = arith.constant 0 : index
    %c0_54 = arith.constant 0 : index
    %133 = vector.load %arg9[%c0_53, %c0_54] : memref<4x1xf32, #tpu.memory_space<vmem>>, vector<4x1xf32>
    %134 = vector.broadcast %133 : vector<4x1xf32> to vector<4x64xf32>
    %135 = arith.addf %132, %134 : vector<4x64xf32>
    %136 = arith.addf %3, %135 : vector<4x64xf32>
    %cst_55 = arith.constant 5.000000e-01 : f32
    %137 = vector.broadcast %cst_55 : f32 to vector<4x64xf32>
    %138 = arith.mulf %137, %136 : vector<4x64xf32>
    %cst_56 = arith.constant 0.707106769 : f32
    %139 = vector.broadcast %cst_56 : f32 to vector<4x64xf32>
    %140 = arith.mulf %136, %139 : vector<4x64xf32>
    %cst_57 = arith.constant 0.000000e+00 : f32
    %141 = vector.broadcast %cst_57 : f32 to vector<4x64xf32>
    %142 = arith.cmpf oge, %140, %141 : vector<4x64xf32>
    %cst_58 = arith.constant 1.000000e+00 : f32
    %cst_59 = arith.constant -1.000000e+00 : f32
    %143 = vector.broadcast %cst_58 : f32 to vector<4x64xf32>
    %144 = vector.broadcast %cst_59 : f32 to vector<4x64xf32>
    %145 = arith.select %142, %143, %144 : vector<4x64xi1>, vector<4x64xf32>
    %146 = math.absf %140 : vector<4x64xf32>
    %cst_60 = arith.constant 0.327591091 : f32
    %147 = vector.broadcast %cst_60 : f32 to vector<4x64xf32>
    %148 = arith.mulf %147, %146 : vector<4x64xf32>
    %cst_61 = arith.constant 1.000000e+00 : f32
    %149 = vector.broadcast %cst_61 : f32 to vector<4x64xf32>
    %150 = arith.addf %149, %148 : vector<4x64xf32>
    %151 = tpu.reciprocal %150 {approx = true} : vector<4x64xf32> -> vector<4x64xf32>
    %152 = arith.mulf %150, %151 : vector<4x64xf32>
    %cst_62 = arith.constant 2.000000e+00 : f32
    %153 = vector.broadcast %cst_62 : f32 to vector<4x64xf32>
    %154 = arith.subf %153, %152 : vector<4x64xf32>
    %155 = arith.mulf %151, %154 : vector<4x64xf32>
    %cst_63 = arith.constant 1.06140542 : f32
    %156 = vector.broadcast %cst_63 : f32 to vector<4x64xf32>
    %157 = arith.mulf %156, %155 : vector<4x64xf32>
    %cst_64 = arith.constant -1.45315206 : f32
    %158 = vector.broadcast %cst_64 : f32 to vector<4x64xf32>
    %159 = arith.addf %157, %158 : vector<4x64xf32>
    %160 = arith.mulf %159, %155 : vector<4x64xf32>
    %cst_65 = arith.constant 1.42141378 : f32
    %161 = vector.broadcast %cst_65 : f32 to vector<4x64xf32>
    %162 = arith.addf %160, %161 : vector<4x64xf32>
    %163 = arith.mulf %162, %155 : vector<4x64xf32>
    %cst_66 = arith.constant -0.284496725 : f32
    %164 = vector.broadcast %cst_66 : f32 to vector<4x64xf32>
    %165 = arith.addf %163, %164 : vector<4x64xf32>
    %166 = arith.mulf %165, %155 : vector<4x64xf32>
    %cst_67 = arith.constant 0.254829586 : f32
    %167 = vector.broadcast %cst_67 : f32 to vector<4x64xf32>
    %168 = arith.addf %166, %167 : vector<4x64xf32>
    %169 = arith.mulf %168, %155 : vector<4x64xf32>
    %cst_68 = arith.constant 0.000000e+00 : f32
    %170 = vector.broadcast %cst_68 : f32 to vector<4x64xf32>
    %171 = arith.subf %170, %146 : vector<4x64xf32>
    %172 = arith.mulf %171, %146 : vector<4x64xf32>
    %173 = math.exp %172 : vector<4x64xf32>
    %174 = arith.mulf %169, %173 : vector<4x64xf32>
    %cst_69 = arith.constant 1.000000e+00 : f32
    %175 = vector.broadcast %cst_69 : f32 to vector<4x64xf32>
    %176 = arith.subf %175, %174 : vector<4x64xf32>
    %177 = arith.mulf %145, %176 : vector<4x64xf32>
    %cst_70 = arith.constant 1.000000e+00 : f32
    %178 = vector.broadcast %cst_70 : f32 to vector<4x64xf32>
    %179 = arith.addf %178, %177 : vector<4x64xf32>
    %180 = arith.mulf %138, %179 : vector<4x64xf32>
    %c0_71 = arith.constant 0 : index
    %c0_72 = arith.constant 0 : index
    %181 = vector.load %arg10[%c0_71, %c0_72] : memref<8x36xf32, #tpu.memory_space<vmem>>, vector<8x36xf32>
    %c9_i32_73 = arith.constant 9 : i32
    %182 = tpu.dynamic_rotate %180 by %c9_i32_73 dim 1 : vector<4x64xf32>, i32 -> vector<4x64xf32>
    %c8_i32_74 = arith.constant 8 : i32
    %183 = tpu.dynamic_rotate %180 by %c8_i32_74 dim 1 : vector<4x64xf32>, i32 -> vector<4x64xf32>
    %c7_i32_75 = arith.constant 7 : i32
    %184 = tpu.dynamic_rotate %180 by %c7_i32_75 dim 1 : vector<4x64xf32>, i32 -> vector<4x64xf32>
    %c1_i32_76 = arith.constant 1 : i32
    %185 = tpu.dynamic_rotate %180 by %c1_i32_76 dim 1 : vector<4x64xf32>, i32 -> vector<4x64xf32>
    %c63_i32_77 = arith.constant 63 : i32
    %186 = tpu.dynamic_rotate %180 by %c63_i32_77 dim 1 : vector<4x64xf32>, i32 -> vector<4x64xf32>
    %c57_i32_78 = arith.constant 57 : i32
    %187 = tpu.dynamic_rotate %180 by %c57_i32_78 dim 1 : vector<4x64xf32>, i32 -> vector<4x64xf32>
    %c56_i32_79 = arith.constant 56 : i32
    %188 = tpu.dynamic_rotate %180 by %c56_i32_79 dim 1 : vector<4x64xf32>, i32 -> vector<4x64xf32>
    %c55_i32_80 = arith.constant 55 : i32
    %189 = tpu.dynamic_rotate %180 by %c55_i32_80 dim 1 : vector<4x64xf32>, i32 -> vector<4x64xf32>
    %190 = tpu.concatenate %182, %183, %184, %185, %180, %186, %187, %188, %189 in 0 : vector<4x64xf32>, vector<4x64xf32>, vector<4x64xf32>, vector<4x64xf32>, vector<4x64xf32>, vector<4x64xf32>, vector<4x64xf32>, vector<4x64xf32>, vector<4x64xf32> -> vector<36x64xf32>
    %191 = arith.mulf %190, %0 : vector<36x64xf32>
    %cst_81 = arith.constant dense<0.000000e+00> : vector<8x64xf32>
    %192 = tpu.matmul %181, %191, %cst_81 {dimension_numbers = #tpu.dot_dimension_numbers<[1], [0], [0], [1], [0, 0, 1, 1], [], []>} : vector<8x36xf32>, vector<36x64xf32>, vector<8x64xf32> -> vector<8x64xf32>
    %193 = vector.shape_cast %192 : vector<8x64xf32> to vector<1x8x64xf32>
    %cst_82 = arith.constant dense<0.000000e+00> : vector<1xf32>
    %194 = vector.multi_reduction <add>, %193, %cst_82 [1, 2] : vector<1x8x64xf32> to vector<1xf32>
    %195 = vector.shape_cast %194 : vector<1xf32> to vector<1x1x1xf32>
    %196 = vector.extract %195[0, 0, 0] : f32 from vector<1x1x1xf32>
    %197 = vector.broadcast %196 : f32 to vector<1x1xf32>
    %cst_83 = arith.constant 0.001953125 : f32
    %198 = vector.broadcast %cst_83 : f32 to vector<1x1xf32>
    %199 = arith.mulf %197, %198 : vector<1x1xf32>
    %200 = arith.mulf %192, %192 : vector<8x64xf32>
    %201 = vector.shape_cast %200 : vector<8x64xf32> to vector<1x8x64xf32>
    %cst_84 = arith.constant dense<0.000000e+00> : vector<1xf32>
    %202 = vector.multi_reduction <add>, %201, %cst_84 [1, 2] : vector<1x8x64xf32> to vector<1xf32>
    %203 = vector.shape_cast %202 : vector<1xf32> to vector<1x1x1xf32>
    %204 = vector.extract %203[0, 0, 0] : f32 from vector<1x1x1xf32>
    %205 = vector.broadcast %204 : f32 to vector<1x1xf32>
    %cst_85 = arith.constant 0.001953125 : f32
    %206 = vector.broadcast %cst_85 : f32 to vector<1x1xf32>
    %207 = arith.mulf %205, %206 : vector<1x1xf32>
    %208 = arith.mulf %199, %199 : vector<1x1xf32>
    %209 = arith.subf %207, %208 : vector<1x1xf32>
    %cst_86 = arith.constant 0.000000e+00 : f32
    %210 = vector.broadcast %cst_86 : f32 to vector<1x1xf32>
    %211 = arith.maximumf %209, %210 : vector<1x1xf32>
    %212 = vector.broadcast %199 : vector<1x1xf32> to vector<8x64xf32>
    %213 = arith.subf %192, %212 : vector<8x64xf32>
    %cst_87 = arith.constant 9.99999974E-6 : f32
    %214 = vector.broadcast %cst_87 : f32 to vector<1x1xf32>
    %215 = arith.addf %211, %214 : vector<1x1xf32>
    %216 = math.rsqrt %215 : vector<1x1xf32>
    %217 = vector.broadcast %216 : vector<1x1xf32> to vector<8x64xf32>
    %218 = arith.mulf %213, %217 : vector<8x64xf32>
    %c0_88 = arith.constant 0 : index
    %c0_89 = arith.constant 0 : index
    %219 = vector.load %arg11[%c0_88, %c0_89] : memref<8x1xf32, #tpu.memory_space<vmem>>, vector<8x1xf32>
    %220 = vector.broadcast %219 : vector<8x1xf32> to vector<8x64xf32>
    %221 = arith.mulf %218, %220 : vector<8x64xf32>
    %c0_90 = arith.constant 0 : index
    %c0_91 = arith.constant 0 : index
    %222 = vector.load %arg12[%c0_90, %c0_91] : memref<8x1xf32, #tpu.memory_space<vmem>>, vector<8x1xf32>
    %223 = vector.broadcast %222 : vector<8x1xf32> to vector<8x64xf32>
    %224 = arith.addf %221, %223 : vector<8x64xf32>
    %cst_92 = arith.constant 5.000000e-01 : f32
    %225 = vector.broadcast %cst_92 : f32 to vector<8x64xf32>
    %226 = arith.mulf %225, %224 : vector<8x64xf32>
    %cst_93 = arith.constant 0.707106769 : f32
    %227 = vector.broadcast %cst_93 : f32 to vector<8x64xf32>
    %228 = arith.mulf %224, %227 : vector<8x64xf32>
    %cst_94 = arith.constant 0.000000e+00 : f32
    %229 = vector.broadcast %cst_94 : f32 to vector<8x64xf32>
    %230 = arith.cmpf oge, %228, %229 : vector<8x64xf32>
    %cst_95 = arith.constant 1.000000e+00 : f32
    %cst_96 = arith.constant -1.000000e+00 : f32
    %231 = vector.broadcast %cst_95 : f32 to vector<8x64xf32>
    %232 = vector.broadcast %cst_96 : f32 to vector<8x64xf32>
    %233 = arith.select %230, %231, %232 : vector<8x64xi1>, vector<8x64xf32>
    %234 = math.absf %228 : vector<8x64xf32>
    %cst_97 = arith.constant 0.327591091 : f32
    %235 = vector.broadcast %cst_97 : f32 to vector<8x64xf32>
    %236 = arith.mulf %235, %234 : vector<8x64xf32>
    %cst_98 = arith.constant 1.000000e+00 : f32
    %237 = vector.broadcast %cst_98 : f32 to vector<8x64xf32>
    %238 = arith.addf %237, %236 : vector<8x64xf32>
    %239 = tpu.reciprocal %238 {approx = true} : vector<8x64xf32> -> vector<8x64xf32>
    %240 = arith.mulf %238, %239 : vector<8x64xf32>
    %cst_99 = arith.constant 2.000000e+00 : f32
    %241 = vector.broadcast %cst_99 : f32 to vector<8x64xf32>
    %242 = arith.subf %241, %240 : vector<8x64xf32>
    %243 = arith.mulf %239, %242 : vector<8x64xf32>
    %cst_100 = arith.constant 1.06140542 : f32
    %244 = vector.broadcast %cst_100 : f32 to vector<8x64xf32>
    %245 = arith.mulf %244, %243 : vector<8x64xf32>
    %cst_101 = arith.constant -1.45315206 : f32
    %246 = vector.broadcast %cst_101 : f32 to vector<8x64xf32>
    %247 = arith.addf %245, %246 : vector<8x64xf32>
    %248 = arith.mulf %247, %243 : vector<8x64xf32>
    %cst_102 = arith.constant 1.42141378 : f32
    %249 = vector.broadcast %cst_102 : f32 to vector<8x64xf32>
    %250 = arith.addf %248, %249 : vector<8x64xf32>
    %251 = arith.mulf %250, %243 : vector<8x64xf32>
    %cst_103 = arith.constant -0.284496725 : f32
    %252 = vector.broadcast %cst_103 : f32 to vector<8x64xf32>
    %253 = arith.addf %251, %252 : vector<8x64xf32>
    %254 = arith.mulf %253, %243 : vector<8x64xf32>
    %cst_104 = arith.constant 0.254829586 : f32
    %255 = vector.broadcast %cst_104 : f32 to vector<8x64xf32>
    %256 = arith.addf %254, %255 : vector<8x64xf32>
    %257 = arith.mulf %256, %243 : vector<8x64xf32>
    %cst_105 = arith.constant 0.000000e+00 : f32
    %258 = vector.broadcast %cst_105 : f32 to vector<8x64xf32>
    %259 = arith.subf %258, %234 : vector<8x64xf32>
    %260 = arith.mulf %259, %234 : vector<8x64xf32>
    %261 = math.exp %260 : vector<8x64xf32>
    %262 = arith.mulf %257, %261 : vector<8x64xf32>
    %cst_106 = arith.constant 1.000000e+00 : f32
    %263 = vector.broadcast %cst_106 : f32 to vector<8x64xf32>
    %264 = arith.subf %263, %262 : vector<8x64xf32>
    %265 = arith.mulf %233, %264 : vector<8x64xf32>
    %cst_107 = arith.constant 1.000000e+00 : f32
    %266 = vector.broadcast %cst_107 : f32 to vector<8x64xf32>
    %267 = arith.addf %266, %265 : vector<8x64xf32>
    %268 = arith.mulf %226, %267 : vector<8x64xf32>
    %c0_108 = arith.constant 0 : index
    %c0_109 = arith.constant 0 : index
    %269 = vector.load %arg13[%c0_108, %c0_109] : memref<8x72xf32, #tpu.memory_space<vmem>>, vector<8x72xf32>
    %c9_i32_110 = arith.constant 9 : i32
    %270 = tpu.dynamic_rotate %268 by %c9_i32_110 dim 1 : vector<8x64xf32>, i32 -> vector<8x64xf32>
    %c8_i32_111 = arith.constant 8 : i32
    %271 = tpu.dynamic_rotate %268 by %c8_i32_111 dim 1 : vector<8x64xf32>, i32 -> vector<8x64xf32>
    %c7_i32_112 = arith.constant 7 : i32
    %272 = tpu.dynamic_rotate %268 by %c7_i32_112 dim 1 : vector<8x64xf32>, i32 -> vector<8x64xf32>
    %c1_i32_113 = arith.constant 1 : i32
    %273 = tpu.dynamic_rotate %268 by %c1_i32_113 dim 1 : vector<8x64xf32>, i32 -> vector<8x64xf32>
    %c63_i32_114 = arith.constant 63 : i32
    %274 = tpu.dynamic_rotate %268 by %c63_i32_114 dim 1 : vector<8x64xf32>, i32 -> vector<8x64xf32>
    %c57_i32_115 = arith.constant 57 : i32
    %275 = tpu.dynamic_rotate %268 by %c57_i32_115 dim 1 : vector<8x64xf32>, i32 -> vector<8x64xf32>
    %c56_i32_116 = arith.constant 56 : i32
    %276 = tpu.dynamic_rotate %268 by %c56_i32_116 dim 1 : vector<8x64xf32>, i32 -> vector<8x64xf32>
    %c55_i32_117 = arith.constant 55 : i32
    %277 = tpu.dynamic_rotate %268 by %c55_i32_117 dim 1 : vector<8x64xf32>, i32 -> vector<8x64xf32>
    %278 = tpu.concatenate %270, %271, %272, %273, %268, %274, %275, %276, %277 in 0 : vector<8x64xf32>, vector<8x64xf32>, vector<8x64xf32>, vector<8x64xf32>, vector<8x64xf32>, vector<8x64xf32>, vector<8x64xf32>, vector<8x64xf32>, vector<8x64xf32> -> vector<72x64xf32>
    %279 = arith.mulf %278, %1 : vector<72x64xf32>
    %cst_118 = arith.constant dense<0.000000e+00> : vector<8x64xf32>
    %280 = tpu.matmul %269, %279, %cst_118 {dimension_numbers = #tpu.dot_dimension_numbers<[1], [0], [0], [1], [0, 0, 1, 1], [], []>} : vector<8x72xf32>, vector<72x64xf32>, vector<8x64xf32> -> vector<8x64xf32>
    %281 = vector.shape_cast %280 : vector<8x64xf32> to vector<1x8x64xf32>
    %cst_119 = arith.constant dense<0.000000e+00> : vector<1xf32>
    %282 = vector.multi_reduction <add>, %281, %cst_119 [1, 2] : vector<1x8x64xf32> to vector<1xf32>
    %283 = vector.shape_cast %282 : vector<1xf32> to vector<1x1x1xf32>
    %284 = vector.extract %283[0, 0, 0] : f32 from vector<1x1x1xf32>
    %285 = vector.broadcast %284 : f32 to vector<1x1xf32>
    %cst_120 = arith.constant 0.001953125 : f32
    %286 = vector.broadcast %cst_120 : f32 to vector<1x1xf32>
    %287 = arith.mulf %285, %286 : vector<1x1xf32>
    %288 = arith.mulf %280, %280 : vector<8x64xf32>
    %289 = vector.shape_cast %288 : vector<8x64xf32> to vector<1x8x64xf32>
    %cst_121 = arith.constant dense<0.000000e+00> : vector<1xf32>
    %290 = vector.multi_reduction <add>, %289, %cst_121 [1, 2] : vector<1x8x64xf32> to vector<1xf32>
    %291 = vector.shape_cast %290 : vector<1xf32> to vector<1x1x1xf32>
    %292 = vector.extract %291[0, 0, 0] : f32 from vector<1x1x1xf32>
    %293 = vector.broadcast %292 : f32 to vector<1x1xf32>
    %cst_122 = arith.constant 0.001953125 : f32
    %294 = vector.broadcast %cst_122 : f32 to vector<1x1xf32>
    %295 = arith.mulf %293, %294 : vector<1x1xf32>
    %296 = arith.mulf %287, %287 : vector<1x1xf32>
    %297 = arith.subf %295, %296 : vector<1x1xf32>
    %cst_123 = arith.constant 0.000000e+00 : f32
    %298 = vector.broadcast %cst_123 : f32 to vector<1x1xf32>
    %299 = arith.maximumf %297, %298 : vector<1x1xf32>
    %300 = vector.broadcast %287 : vector<1x1xf32> to vector<8x64xf32>
    %301 = arith.subf %280, %300 : vector<8x64xf32>
    %cst_124 = arith.constant 9.99999974E-6 : f32
    %302 = vector.broadcast %cst_124 : f32 to vector<1x1xf32>
    %303 = arith.addf %299, %302 : vector<1x1xf32>
    %304 = math.rsqrt %303 : vector<1x1xf32>
    %305 = vector.broadcast %304 : vector<1x1xf32> to vector<8x64xf32>
    %306 = arith.mulf %301, %305 : vector<8x64xf32>
    %c0_125 = arith.constant 0 : index
    %c0_126 = arith.constant 0 : index
    %307 = vector.load %arg14[%c0_125, %c0_126] : memref<8x1xf32, #tpu.memory_space<vmem>>, vector<8x1xf32>
    %308 = vector.broadcast %307 : vector<8x1xf32> to vector<8x64xf32>
    %309 = arith.mulf %306, %308 : vector<8x64xf32>
    %c0_127 = arith.constant 0 : index
    %c0_128 = arith.constant 0 : index
    %310 = vector.load %arg15[%c0_127, %c0_128] : memref<8x1xf32, #tpu.memory_space<vmem>>, vector<8x1xf32>
    %311 = vector.broadcast %310 : vector<8x1xf32> to vector<8x64xf32>
    %312 = arith.addf %309, %311 : vector<8x64xf32>
    %c0_129 = arith.constant 0 : index
    %c0_130 = arith.constant 0 : index
    %c0_131 = arith.constant 0 : index
    %313 = vector.load %arg16[%c0_129, %c0_130, %c0_131] : memref<1x8x64xf32, #tpu.memory_space<vmem>>, vector<1x8x64xf32>
    %314 = vector.shape_cast %313 : vector<1x8x64xf32> to vector<8x64xf32>
    %315 = vector.shape_cast %312 : vector<8x64xf32> to vector<1x8x64xf32>
    tpu.vector_store %arg16[%c0_129, %c0_130, %c0_131], %315 {strides = array<i32>} : memref<1x8x64xf32, #tpu.memory_space<vmem>>, vector<1x8x64xf32>,
    return
  }
  func.func @transform_0(%arg0: i32) -> (i32, i32) {
    %c0_i32 = arith.constant 0 : i32
    %c0_i32_0 = arith.constant 0 : i32
    %c0_i32_1 = arith.constant 0 : i32
    return %c0_i32, %c0_i32_0 : i32, i32
  }
  func.func @transform_1(%arg0: i32) -> (i32, i32) {
    %c0_i32 = arith.constant 0 : i32
    %c0_i32_0 = arith.constant 0 : i32
    %c0_i32_1 = arith.constant 0 : i32
    return %c0_i32, %c0_i32_0 : i32, i32
  }
  func.func @transform_2(%arg0: i32) -> (i32, i32, i32) {
    %c0_i32 = arith.constant 0 : i32
    %c0_i32_0 = arith.constant 0 : i32
    %c0_i32_1 = arith.constant 0 : i32
    return %arg0, %c0_i32, %c0_i32_0 : i32, i32, i32
  }
  func.func @transform_3(%arg0: i32) -> (i32, i32) {
    %c0_i32 = arith.constant 0 : i32
    %c0_i32_0 = arith.constant 0 : i32
    %c0_i32_1 = arith.constant 0 : i32
    return %c0_i32, %c0_i32_0 : i32, i32
  }
  func.func @transform_4(%arg0: i32) -> (i32, i32) {
    %c0_i32 = arith.constant 0 : i32
    %c0_i32_0 = arith.constant 0 : i32
    %c0_i32_1 = arith.constant 0 : i32
    return %c0_i32, %c0_i32_0 : i32, i32
  }
  func.func @transform_5(%arg0: i32) -> (i32, i32) {
    %c0_i32 = arith.constant 0 : i32
    %c0_i32_0 = arith.constant 0 : i32
    %c0_i32_1 = arith.constant 0 : i32
    return %c0_i32, %c0_i32_0 : i32, i32
  }
  func.func @transform_6(%arg0: i32) -> (i32, i32) {
    %c0_i32 = arith.constant 0 : i32
    %c0_i32_0 = arith.constant 0 : i32
    %c0_i32_1 = arith.constant 0 : i32
    return %c0_i32, %c0_i32_0 : i32, i32
  }
  func.func @transform_7(%arg0: i32) -> (i32, i32) {
    %c0_i32 = arith.constant 0 : i32
    %c0_i32_0 = arith.constant 0 : i32
    %c0_i32_1 = arith.constant 0 : i32
    return %c0_i32, %c0_i32_0 : i32, i32
  }
  func.func @transform_8(%arg0: i32) -> (i32, i32) {
    %c0_i32 = arith.constant 0 : i32
    %c0_i32_0 = arith.constant 0 : i32
    %c0_i32_1 = arith.constant 0 : i32
    return %c0_i32, %c0_i32_0 : i32, i32
  }
  func.func @transform_9(%arg0: i32) -> (i32, i32) {
    %c0_i32 = arith.constant 0 : i32
    %c0_i32_0 = arith.constant 0 : i32
    %c0_i32_1 = arith.constant 0 : i32
    return %c0_i32, %c0_i32_0 : i32, i32
  }
  func.func @transform_10(%arg0: i32) -> (i32, i32) {
    %c0_i32 = arith.constant 0 : i32
    %c0_i32_0 = arith.constant 0 : i32
    %c0_i32_1 = arith.constant 0 : i32
    return %c0_i32, %c0_i32_0 : i32, i32
  }
  func.func @transform_11(%arg0: i32) -> (i32, i32) {
    %c0_i32 = arith.constant 0 : i32
    %c0_i32_0 = arith.constant 0 : i32
    %c0_i32_1 = arith.constant 0 : i32
    return %c0_i32, %c0_i32_0 : i32, i32
  }
  func.func @transform_12(%arg0: i32) -> (i32, i32) {
    %c0_i32 = arith.constant 0 : i32
    %c0_i32_0 = arith.constant 0 : i32
    %c0_i32_1 = arith.constant 0 : i32
    return %c0_i32, %c0_i32_0 : i32, i32
  }
  func.func @transform_13(%arg0: i32) -> (i32, i32) {
    %c0_i32 = arith.constant 0 : i32
    %c0_i32_0 = arith.constant 0 : i32
    %c0_i32_1 = arith.constant 0 : i32
    return %c0_i32, %c0_i32_0 : i32, i32
  }
  func.func @transform_14(%arg0: i32) -> (i32, i32) {
    %c0_i32 = arith.constant 0 : i32
    %c0_i32_0 = arith.constant 0 : i32
    %c0_i32_1 = arith.constant 0 : i32
    return %c0_i32, %c0_i32_0 : i32, i32
  }
  func.func @transform_15(%arg0: i32) -> (i32, i32, i32) {
    %c0_i32 = arith.constant 0 : i32
    %c0_i32_0 = arith.constant 0 : i32
    %c0_i32_1 = arith.constant 0 : i32
    return %arg0, %c0_i32, %c0_i32_0 : i32, i32, i32
  }
}

</mosaic_0001>

<llo_original>
// kernel: down_img_forward.1
$region0: #{down_img_forward.1}
  #allocation0 [shape = 'u32[]', space=smem, size = 0x4, offset = 0x4, fixed_abs, tag = 'smem constant byte address 0x4 - core index']
  #allocation1 [shape = 'u32[144,128]{1,0:T(1,128)}', space=vmem, size = 0x12000, scoped, tag = 'internal scratch']
  %s0 = inlined_call_operand.vmem [shape: f32[36,64], index: 0, kind: input, shape index: {}]
  %s1 = inlined_call_operand.vmem [shape: f32[72,64], index: 1, kind: input, shape index: {}]
  %s2 = inlined_call_operand.vmem [shape: f32[2,4,64], index: 2, kind: input, shape index: {}]
  %s3 = inlined_call_operand.vmem [shape: f32[4,36], index: 3, kind: input, shape index: {}]
  %s4 = inlined_call_operand.vmem [shape: f32[4,1], index: 4, kind: input, shape index: {}]
  %s5 = inlined_call_operand.vmem [shape: f32[4,1], index: 5, kind: input, shape index: {}]
  %s6 = inlined_call_operand.vmem [shape: f32[4,36], index: 6, kind: input, shape index: {}]
  %s7 = inlined_call_operand.vmem [shape: f32[4,1], index: 7, kind: input, shape index: {}]
  %s8 = inlined_call_operand.vmem [shape: f32[4,1], index: 8, kind: input, shape index: {}]
  %s9 = inlined_call_operand.vmem [shape: f32[8,36], index: 9, kind: input, shape index: {}]
  %s10 = inlined_call_operand.vmem [shape: f32[8,1], index: 10, kind: input, shape index: {}]
  %s11 = inlined_call_operand.vmem [shape: f32[8,1], index: 11, kind: input, shape index: {}]
  %s12 = inlined_call_operand.vmem [shape: f32[8,72], index: 12, kind: input, shape index: {}]
  %s13 = inlined_call_operand.vmem [shape: f32[8,1], index: 13, kind: input, shape index: {}]
  %s14 = inlined_call_operand.vmem [shape: f32[8,1], index: 14, kind: input, shape index: {}]
  %s15 = inlined_call_operand.vmem [shape: f32[2,8,64], index: 15, kind: output, shape index: {}]
  %s16 = sld [smem:[#allocation0]]
  $region93: #{down_img_forward.1} parent=0
    _
  %s18 = ssub.s32 1, %s16
  %s19 = scalar_select 0, %s18, %s16
  loop: start=0, step=1, limit=4
  $region2: #{down_img_forward.1} parent=0 // loop_pre_header
    _
  $region3: #{down_img_forward.1} parent=0 // loop_header
    %s21 = sphi 0, %s25
    %p22 = scmp.ge.s32.totalorder %s21, 4
    %s29 = sphi 0, %s29
    %s31 = sphi 0, %s29
    %s32 = sphi 0, %s31
    %s46 = sphi 0, %s32
    %s50 = sphi 0, %s50
    %s52 = sphi 0, %s50
    %s53 = sphi 0, %s52
    %s67 = sphi 0, %s53
    %s73 = sphi 0, %s75
    %s76 = sphi 0, %s73
    %s77 = sphi 0, %s76
    %s93 = sphi 0, %s77
    %s97 = sphi 0, %s97
    %s99 = sphi 0, %s97
    %s100 = sphi 0, %s99
    %s114 = sphi 0, %s100
    %s118 = sphi 0, %s118
    %s120 = sphi 0, %s118
    %s121 = sphi 0, %s120
    %s135 = sphi 0, %s121
    %s139 = sphi 0, %s139
    %s141 = sphi 0, %s139
    %s142 = sphi 0, %s141
    %s156 = sphi 0, %s142
    %s160 = sphi 0, %s160
    %s162 = sphi 0, %s160
    %s163 = sphi 0, %s162
    %s177 = sphi 0, %s163
    %s181 = sphi 0, %s181
    %s183 = sphi 0, %s181
    %s184 = sphi 0, %s183
    %s198 = sphi 0, %s184
    %s202 = sphi 0, %s202
    %s204 = sphi 0, %s202
    %s205 = sphi 0, %s204
    %s219 = sphi 0, %s205
    %s223 = sphi 0, %s223
    %s225 = sphi 0, %s223
    %s226 = sphi 0, %s225
    %s240 = sphi 0, %s226
    %s244 = sphi 0, %s244
    %s246 = sphi 0, %s244
    %s247 = sphi 0, %s246
    %s261 = sphi 0, %s247
    %s265 = sphi 0, %s265
    %s267 = sphi 0, %s265
    %s268 = sphi 0, %s267
    %s282 = sphi 0, %s268
    %s286 = sphi 0, %s286
    %s288 = sphi 0, %s286
    %s289 = sphi 0, %s288
    %s303 = sphi 0, %s289
    %s307 = sphi 0, %s307
    %s309 = sphi 0, %s307
    %s310 = sphi 0, %s309
    %s324 = sphi 0, %s310
    %s328 = sphi 0, %s328
    %s330 = sphi 0, %s328
    %s331 = sphi 0, %s330
    %s345 = sphi 0, %s331
    %s351 = sphi 0, %s353
    %s354 = sphi 0, %s351
    %s355 = sphi 0, %s354
    %s371 = sphi 0, %s355
  $region4: #{down_img_forward.1} parent=0 // loop_header_branch
    %24 = sbr.rel (%p22) target = $region8
  $region5: #{down_img_forward.1} parent=0 // loop_body
    %s26 = ssub.s32 %s21, 1
    %s27 = ssub.s32 %s21, 2
    %s28 = sadd.s32 %s21, 1
    %s30 = sadd.s32 %s29, 1
    %p33 = scmp.eq.s32.totalorder %s21, 1
    %p34 = scmp.ne.s32.totalorder %s29, %s31
    %p35 = scmp.eq.s32.totalorder %s21, 0
    %p36 = por %p34, %p35
    %p37 = scmp.ne.s32.totalorder %s29, %s31
    %p38 = scmp.eq.s32.totalorder %s26, 1
    %p39 = por %p37, %p38
    %p40 = scmp.ne.s32.totalorder %s31, %s32
    %p41 = scmp.eq.s32.totalorder %s26, 0
    %p42 = por %p40, %p41
    %p43 = scmp.ne.s32.totalorder %s31, %s32
    %p44 = scmp.eq.s32.totalorder %s27, 1
    %p45 = por %p43, %p44
    %p47 = scmp.ne.s32.totalorder %s32, %s46
    %p48 = scmp.eq.s32.totalorder %s27, 0
    %p49 = por %p47, %p48
    %s51 = sadd.s32 %s50, 1
    %p54 = scmp.eq.s32.totalorder %s21, 1
    %p55 = scmp.ne.s32.totalorder %s50, %s52
    %p56 = scmp.eq.s32.totalorder %s21, 0
    %p57 = por %p55, %p56
    %p58 = scmp.ne.s32.totalorder %s50, %s52
    %p59 = scmp.eq.s32.totalorder %s26, 1
    %p60 = por %p58, %p59
    %p61 = scmp.ne.s32.totalorder %s52, %s53
    %p62 = scmp.eq.s32.totalorder %s26, 0
    %p63 = por %p61, %p62
    %p64 = scmp.ne.s32.totalorder %s52, %s53
    %p65 = scmp.eq.s32.totalorder %s27, 1
    %p66 = por %p64, %p65
    %p68 = scmp.ne.s32.totalorder %s53, %s67
    %p69 = scmp.eq.s32.totalorder %s27, 0
    %p70 = por %p68, %p69
    %s71 = ssub.s32 %s21, %s28
    %p72 = scmp.eq.s32.totalorder %s71, 0
    %s74 = sadd.s32 %s73, 1
    %s75 = scalar_select %p72, %s73, %s74
    %p78 = pneg %p72
    %p79 = scmp.eq.s32.totalorder %s21, 1
    %p80 = por %p78, %p79
    %p81 = scmp.ne.s32.totalorder %s73, %s76
    %p82 = scmp.eq.s32.totalorder %s21, 0
    %p83 = por %p81, %p82
    %p84 = scmp.ne.s32.totalorder %s73, %s76
    %p85 = scmp.eq.s32.totalorder %s26, 1
    %p86 = por %p84, %p85
    %p87 = scmp.ne.s32.totalorder %s76, %s77
    %p88 = scmp.eq.s32.totalorder %s26, 0
    %p89 = por %p87, %p88
    %p90 = scmp.ne.s32.totalorder %s76, %s77
    %p91 = scmp.eq.s32.totalorder %s27, 1
    %p92 = por %p90, %p91
    %p94 = scmp.ne.s32.totalorder %s77, %s93
    %p95 = scmp.eq.s32.totalorder %s27, 0
    %p96 = por %p94, %p95
    %s98 = sadd.s32 %s97, 1
    %p101 = scmp.eq.s32.totalorder %s21, 1
    %p102 = scmp.ne.s32.totalorder %s97, %s99
    %p103 = scmp.eq.s32.totalorder %s21, 0
    %p104 = por %p102, %p103
    %p105 = scmp.ne.s32.totalorder %s97, %s99
    %p106 = scmp.eq.s32.totalorder %s26, 1
    %p107 = por %p105, %p106
    %p108 = scmp.ne.s32.totalorder %s99, %s100
    %p109 = scmp.eq.s32.totalorder %s26, 0
    %p110 = por %p108, %p109
    %p111 = scmp.ne.s32.totalorder %s99, %s100
    %p112 = scmp.eq.s32.totalorder %s27, 1
    %p113 = por %p111, %p112
    %p115 = scmp.ne.s32.totalorder %s100, %s114
    %p116 = scmp.eq.s32.totalorder %s27, 0
    %p117 = por %p115, %p116
    %s119 = sadd.s32 %s118, 1
    %p122 = scmp.eq.s32.totalorder %s21, 1
    %p123 = scmp.ne.s32.totalorder %s118, %s120
    %p124 = scmp.eq.s32.totalorder %s21, 0
    %p125 = por %p123, %p124
    %p126 = scmp.ne.s32.totalorder %s118, %s120
    %p127 = scmp.eq.s32.totalorder %s26, 1
    %p128 = por %p126, %p127
    %p129 = scmp.ne.s32.totalorder %s120, %s121
    %p130 = scmp.eq.s32.totalorder %s26, 0
    %p131 = por %p129, %p130
    %p132 = scmp.ne.s32.totalorder %s120, %s121
    %p133 = scmp.eq.s32.totalorder %s27, 1
    %p134 = por %p132, %p133
    %p136 = scmp.ne.s32.totalorder %s121, %s135
    %p137 = scmp.eq.s32.totalorder %s27, 0
    %p138 = por %p136, %p137
    %s140 = sadd.s32 %s139, 1
    %p143 = scmp.eq.s32.totalorder %s21, 1
    %p144 = scmp.ne.s32.totalorder %s139, %s141
    %p145 = scmp.eq.s32.totalorder %s21, 0
    %p146 = por %p144, %p145
    %p147 = scmp.ne.s32.totalorder %s139, %s141
    %p148 = scmp.eq.s32.totalorder %s26, 1
    %p149 = por %p147, %p148
    %p150 = scmp.ne.s32.totalorder %s141, %s142
    %p151 = scmp.eq.s32.totalorder %s26, 0
    %p152 = por %p150, %p151
    %p153 = scmp.ne.s32.totalorder %s141, %s142
    %p154 = scmp.eq.s32.totalorder %s27, 1
    %p155 = por %p153, %p154
    %p157 = scmp.ne.s32.totalorder %s142, %s156
    %p158 = scmp.eq.s32.totalorder %s27, 0
    %p159 = por %p157, %p158
    %s161 = sadd.s32 %s160, 1
    %p164 = scmp.eq.s32.totalorder %s21, 1
    %p165 = scmp.ne.s32.totalorder %s160, %s162
    %p166 = scmp.eq.s32.totalorder %s21, 0
    %p167 = por %p165, %p166
    %p168 = scmp.ne.s32.totalorder %s160, %s162
    %p169 = scmp.eq.s32.totalorder %s26, 1
    %p170 = por %p168, %p169
    %p171 = scmp.ne.s32.totalorder %s162, %s163
    %p172 = scmp.eq.s32.totalorder %s26, 0
    %p173 = por %p171, %p172
    %p174 = scmp.ne.s32.totalorder %s162, %s163
    %p175 = scmp.eq.s32.totalorder %s27, 1
    %p176 = por %p174, %p175
    %p178 = scmp.ne.s32.totalorder %s163, %s177
    %p179 = scmp.eq.s32.totalorder %s27, 0
    %p180 = por %p178, %p179
    %s182 = sadd.s32 %s181, 1
    %p185 = scmp.eq.s32.totalorder %s21, 1
    %p186 = scmp.ne.s32.totalorder %s181, %s183
    %p187 = scmp.eq.s32.totalorder %s21, 0
    %p188 = por %p186, %p187
    %p189 = scmp.ne.s32.totalorder %s181, %s183
    %p190 = scmp.eq.s32.totalorder %s26, 1
    %p191 = por %p189, %p190
    %p192 = scmp.ne.s32.totalorder %s183, %s184
    %p193 = scmp.eq.s32.totalorder %s26, 0
    %p194 = por %p192, %p193
    %p195 = scmp.ne.s32.totalorder %s183, %s184
    %p196 = scmp.eq.s32.totalorder %s27, 1
    %p197 = por %p195, %p196
    %p199 = scmp.ne.s32.totalorder %s184, %s198
    %p200 = scmp.eq.s32.totalorder %s27, 0
    %p201 = por %p199, %p200
    %s203 = sadd.s32 %s202, 1
    %p206 = scmp.eq.s32.totalorder %s21, 1
    %p207 = scmp.ne.s32.totalorder %s202, %s204
    %p208 = scmp.eq.s32.totalorder %s21, 0
    %p209 = por %p207, %p208
    %p210 = scmp.ne.s32.totalorder %s202, %s204
    %p211 = scmp.eq.s32.totalorder %s26, 1
    %p212 = por %p210, %p211
    %p213 = scmp.ne.s32.totalorder %s204, %s205
    %p214 = scmp.eq.s32.totalorder %s26, 0
    %p215 = por %p213, %p214
    %p216 = scmp.ne.s32.totalorder %s204, %s205
    %p217 = scmp.eq.s32.totalorder %s27, 1
    %p218 = por %p216, %p217
    %p220 = scmp.ne.s32.totalorder %s205, %s219
    %p221 = scmp.eq.s32.totalorder %s27, 0
    %p222 = por %p220, %p221
    %s224 = sadd.s32 %s223, 1
    %p227 = scmp.eq.s32.totalorder %s21, 1
    %p228 = scmp.ne.s32.totalorder %s223, %s225
    %p229 = scmp.eq.s32.totalorder %s21, 0
    %p230 = por %p228, %p229
    %p231 = scmp.ne.s32.totalorder %s223, %s225
    %p232 = scmp.eq.s32.totalorder %s26, 1
    %p233 = por %p231, %p232
    %p234 = scmp.ne.s32.totalorder %s225, %s226
    %p235 = scmp.eq.s32.totalorder %s26, 0
    %p236 = por %p234, %p235
    %p237 = scmp.ne.s32.totalorder %s225, %s226
    %p238 = scmp.eq.s32.totalorder %s27, 1
    %p239 = por %p237, %p238
    %p241 = scmp.ne.s32.totalorder %s226, %s240
    %p242 = scmp.eq.s32.totalorder %s27, 0
    %p243 = por %p241, %p242
    %s245 = sadd.s32 %s244, 1
    %p248 = scmp.eq.s32.totalorder %s21, 1
    %p249 = scmp.ne.s32.totalorder %s244, %s246
    %p250 = scmp.eq.s32.totalorder %s21, 0
    %p251 = por %p249, %p250
    %p252 = scmp.ne.s32.totalorder %s244, %s246
    %p253 = scmp.eq.s32.totalorder %s26, 1
    %p254 = por %p252, %p253
    %p255 = scmp.ne.s32.totalorder %s246, %s247
    %p256 = scmp.eq.s32.totalorder %s26, 0
    %p257 = por %p255, %p256
    %p258 = scmp.ne.s32.totalorder %s246, %s247
    %p259 = scmp.eq.s32.totalorder %s27, 1
    %p260 = por %p258, %p259
    %p262 = scmp.ne.s32.totalorder %s247, %s261
    %p263 = scmp.eq.s32.totalorder %s27, 0
    %p264 = por %p262, %p263
    %s266 = sadd.s32 %s265, 1
    %p269 = scmp.eq.s32.totalorder %s21, 1
    %p270 = scmp.ne.s32.totalorder %s265, %s267
    %p271 = scmp.eq.s32.totalorder %s21, 0
    %p272 = por %p270, %p271
    %p273 = scmp.ne.s32.totalorder %s265, %s267
    %p274 = scmp.eq.s32.totalorder %s26, 1
    %p275 = por %p273, %p274
    %p276 = scmp.ne.s32.totalorder %s267, %s268
    %p277 = scmp.eq.s32.totalorder %s26, 0
    %p278 = por %p276, %p277
    %p279 = scmp.ne.s32.totalorder %s267, %s268
    %p280 = scmp.eq.s32.totalorder %s27, 1
    %p281 = por %p279, %p280
    %p283 = scmp.ne.s32.totalorder %s268, %s282
    %p284 = scmp.eq.s32.totalorder %s27, 0
    %p285 = por %p283, %p284
    %s287 = sadd.s32 %s286, 1
    %p290 = scmp.eq.s32.totalorder %s21, 1
    %p291 = scmp.ne.s32.totalorder %s286, %s288
    %p292 = scmp.eq.s32.totalorder %s21, 0
    %p293 = por %p291, %p292
    %p294 = scmp.ne.s32.totalorder %s286, %s288
    %p295 = scmp.eq.s32.totalorder %s26, 1
    %p296 = por %p294, %p295
    %p297 = scmp.ne.s32.totalorder %s288, %s289
    %p298 = scmp.eq.s32.totalorder %s26, 0
    %p299 = por %p297, %p298
    %p300 = scmp.ne.s32.totalorder %s288, %s289
    %p301 = scmp.eq.s32.totalorder %s27, 1
    %p302 = por %p300, %p301
    %p304 = scmp.ne.s32.totalorder %s289, %s303
    %p305 = scmp.eq.s32.totalorder %s27, 0
    %p306 = por %p304, %p305
    %s308 = sadd.s32 %s307, 1
    %p311 = scmp.eq.s32.totalorder %s21, 1
    %p312 = scmp.ne.s32.totalorder %s307, %s309
    %p313 = scmp.eq.s32.totalorder %s21, 0
    %p314 = por %p312, %p313
    %p315 = scmp.ne.s32.totalorder %s307, %s309
    %p316 = scmp.eq.s32.totalorder %s26, 1
    %p317 = por %p315, %p316
    %p318 = scmp.ne.s32.totalorder %s309, %s310
    %p319 = scmp.eq.s32.totalorder %s26, 0
    %p320 = por %p318, %p319
    %p321 = scmp.ne.s32.totalorder %s309, %s310
    %p322 = scmp.eq.s32.totalorder %s27, 1
    %p323 = por %p321, %p322
    %p325 = scmp.ne.s32.totalorder %s310, %s324
    %p326 = scmp.eq.s32.totalorder %s27, 0
    %p327 = por %p325, %p326
    %s329 = sadd.s32 %s328, 1
    %p332 = scmp.eq.s32.totalorder %s21, 1
    %p333 = scmp.ne.s32.totalorder %s328, %s330
    %p334 = scmp.eq.s32.totalorder %s21, 0
    %p335 = por %p333, %p334
    %p336 = scmp.ne.s32.totalorder %s328, %s330
    %p337 = scmp.eq.s32.totalorder %s26, 1
    %p338 = por %p336, %p337
    %p339 = scmp.ne.s32.totalorder %s330, %s331
    %p340 = scmp.eq.s32.totalorder %s26, 0
    %p341 = por %p339, %p340
    %p342 = scmp.ne.s32.totalorder %s330, %s331
    %p343 = scmp.eq.s32.totalorder %s27, 1
    %p344 = por %p342, %p343
    %p346 = scmp.ne.s32.totalorder %s331, %s345
    %p347 = scmp.eq.s32.totalorder %s27, 0
    %p348 = por %p346, %p347
    %s349 = ssub.s32 %s21, %s28
    %p350 = scmp.eq.s32.totalorder %s349, 0
    %s352 = sadd.s32 %s351, 1
    %s353 = scalar_select %p350, %s351, %s352
    %p356 = pneg %p350
    %p357 = scmp.eq.s32.totalorder %s21, 1
    %p358 = por %p356, %p357
    %p359 = scmp.ne.s32.totalorder %s351, %s354
    %p360 = scmp.eq.s32.totalorder %s21, 0
    %p361 = por %p359, %p360
    %p362 = scmp.ne.s32.totalorder %s351, %s354
    %p363 = scmp.eq.s32.totalorder %s26, 1
    %p364 = por %p362, %p363
    %p365 = scmp.ne.s32.totalorder %s354, %s355
    %p366 = scmp.eq.s32.totalorder %s26, 0
    %p367 = por %p365, %p366
    %p368 = scmp.ne.s32.totalorder %s354, %s355
    %p369 = scmp.eq.s32.totalorder %s27, 1
    %p370 = por %p368, %p369
    %p372 = scmp.ne.s32.totalorder %s355, %s371
    %p373 = scmp.eq.s32.totalorder %s27, 0
    %p374 = por %p372, %p373
    %p375 = scmp.le.s32.totalorder 1, %s21
    %p376 = scmp.lt.s32.totalorder %s21, 3
    %p377 = pnand %p375, %p376
    %p378 = pneg %p377
    // Predicated region
    $region9: #{down_img_forward.1} parent=5 // pred_check
      _
    $region10: #{down_img_forward.1} parent=5 // pred_check_branch
      %380 = sbr.rel (%p377) target = $region12
    $region11: #{down_img_forward.1} parent=5 // pred_region
      %s381 = ssub.s32 %s21, 1
      // Predicated region
      $region13: #{down_img_forward.1} parent=11 // pred_check
        %p382 = pneg %p42
      $region14: #{down_img_forward.1} parent=11 // pred_check_branch
        %384 = sbr.rel (%p382) target = $region16
      $region15: #{down_img_forward.1} parent=11 // pred_region
        _
      $region16: #{down_img_forward.1} parent=11 // pred_fallthru
        _
      // Predicated region
      $region17: #{down_img_forward.1} parent=11 // pred_check
        %p385 = pneg %p63
      $region18: #{down_img_forward.1} parent=11 // pred_check_branch
        %387 = sbr.rel (%p385) target = $region20
      $region19: #{down_img_forward.1} parent=11 // pred_region
        _
      $region20: #{down_img_forward.1} parent=11 // pred_fallthru
        _
      // Predicated region
      $region21: #{down_img_forward.1} parent=11 // pred_check
        %p388 = pneg %p110
      $region22: #{down_img_forward.1} parent=11 // pred_check_branch
        %390 = sbr.rel (%p388) target = $region24
      $region23: #{down_img_forward.1} parent=11 // pred_region
        _
      $region24: #{down_img_forward.1} parent=11 // pred_fallthru
        _
      // Predicated region
      $region25: #{down_img_forward.1} parent=11 // pred_check
        %p391 = pneg %p131
      $region26: #{down_img_forward.1} parent=11 // pred_check_branch
        %393 = sbr.rel (%p391) target = $region28
      $region27: #{down_img_forward.1} parent=11 // pred_region
        _
      $region28: #{down_img_forward.1} parent=11 // pred_fallthru
        _
      // Predicated region
      $region29: #{down_img_forward.1} parent=11 // pred_check
        %p394 = pneg %p152
      $region30: #{down_img_forward.1} parent=11 // pred_check_branch
        %396 = sbr.rel (%p394) target = $region32
      $region31: #{down_img_forward.1} parent=11 // pred_region
        _
      $region32: #{down_img_forward.1} parent=11 // pred_fallthru
        _
      // Predicated region
      $region33: #{down_img_forward.1} parent=11 // pred_check
        %p397 = pneg %p173
      $region34: #{down_img_forward.1} parent=11 // pred_check_branch
        %399 = sbr.rel (%p397) target = $region36
      $region35: #{down_img_forward.1} parent=11 // pred_region
        _
      $region36: #{down_img_forward.1} parent=11 // pred_fallthru
        _
      // Predicated region
      $region37: #{down_img_forward.1} parent=11 // pred_check
        %p400 = pneg %p194
      $region38: #{down_img_forward.1} parent=11 // pred_check_branch
        %402 = sbr.rel (%p400) target = $region40
      $region39: #{down_img_forward.1} parent=11 // pred_region
        _
      $region40: #{down_img_forward.1} parent=11 // pred_fallthru
        _
      // Predicated region
      $region41: #{down_img_forward.1} parent=11 // pred_check
        %p403 = pneg %p215
      $region42: #{down_img_forward.1} parent=11 // pred_check_branch
        %405 = sbr.rel (%p403) target = $region44
      $region43: #{down_img_forward.1} parent=11 // pred_region
        _
      $region44: #{down_img_forward.1} parent=11 // pred_fallthru
        _
      // Predicated region
      $region45: #{down_img_forward.1} parent=11 // pred_check
        %p406 = pneg %p236
      $region46: #{down_img_forward.1} parent=11 // pred_check_branch
        %408 = sbr.rel (%p406) target = $region48
      $region47: #{down_img_forward.1} parent=11 // pred_region
        _
      $region48: #{down_img_forward.1} parent=11 // pred_fallthru
        _
      // Predicated region
      $region49: #{down_img_forward.1} parent=11 // pred_check
        %p409 = pneg %p257
      $region50: #{down_img_forward.1} parent=11 // pred_check_branch
        %411 = sbr.rel (%p409) target = $region52
      $region51: #{down_img_forward.1} parent=11 // pred_region
        _
      $region52: #{down_img_forward.1} parent=11 // pred_fallthru
        _
      // Predicated region
      $region53: #{down_img_forward.1} parent=11 // pred_check
        %p412 = pneg %p278
      $region54: #{down_img_forward.1} parent=11 // pred_check_branch
        %414 = sbr.rel (%p412) target = $region56
      $region55: #{down_img_forward.1} parent=11 // pred_region
        _
      $region56: #{down_img_forward.1} parent=11 // pred_fallthru
        _
      // Predicated region
      $region57: #{down_img_forward.1} parent=11 // pred_check
        %p415 = pneg %p299
      $region58: #{down_img_forward.1} parent=11 // pred_check_branch
        %417 = sbr.rel (%p415) target = $region60
      $region59: #{down_img_forward.1} parent=11 // pred_region
        _
      $region60: #{down_img_forward.1} parent=11 // pred_fallthru
        _
      // Predicated region
      $region61: #{down_img_forward.1} parent=11 // pred_check
        %p418 = pneg %p320
      $region62: #{down_img_forward.1} parent=11 // pred_check_branch
        %420 = sbr.rel (%p418) target = $region64
      $region63: #{down_img_forward.1} parent=11 // pred_region
        _
      $region64: #{down_img_forward.1} parent=11 // pred_fallthru
        _
      // Predicated region
      $region65: #{down_img_forward.1} parent=11 // pred_check
        %p421 = pneg %p341
      $region66: #{down_img_forward.1} parent=11 // pred_check_branch
        %423 = sbr.rel (%p421) target = $region68
      $region67: #{down_img_forward.1} parent=11 // pred_region
        _
      $region68: #{down_img_forward.1} parent=11 // pred_fallthru
        _
    $region12: #{down_img_forward.1} parent=5 // pred_fallthru
      _
    %p424 = scmp.lt.s32.totalorder %s21, 2
    // Predicated region
    $region69: #{down_img_forward.1} parent=5 // pred_check
      %p425 = pneg %p424
    $region70: #{down_img_forward.1} parent=5 // pred_check_branch
      %427 = sbr.rel (%p425) target = $region72
    $region71: #{down_img_forward.1} parent=5 // pred_region
      // Predicated region
      $region73: #{down_img_forward.1} parent=71 // pred_check
        %p428 = pneg %p83
      $region74: #{down_img_forward.1} parent=71 // pred_check_branch
        %430 = sbr.rel (%p428) target = $region76
      $region75: #{down_img_forward.1} parent=71 // pred_region
        %p431 = scmp.lt.s32.totalorder %s21, 1
        %s432 = scalar_select %p431, %s21, 1
        %s433 = smul.addr %s432, 4
        %s434 = scalar_lea.vmem %s2, %s433
      $region76: #{down_img_forward.1} parent=71 // pred_fallthru
        _
    $region72: #{down_img_forward.1} parent=5 // pred_fallthru
      _
    %p435 = scmp.le.s32.totalorder 1, %s21
    %p436 = scmp.lt.s32.totalorder %s21, 3
    %p437 = pnand %p435, %p436
    %p438 = pneg %p437
    // Predicated region
    $region77: #{down_img_forward.1} parent=5 // pred_check
      _
    $region78: #{down_img_forward.1} parent=5 // pred_check_branch
      %440 = sbr.rel (%p437) target = $region80
    $region79: #{down_img_forward.1} parent=5 // pred_region
      %s441 = ssub.s32 %s21, 1
      %p442 = pneg %p42
      %p443 = pneg %p39
      %p444 = pneg %p63
      %p445 = pneg %p60
      %p446 = scmp.lt.s32.totalorder %s26, 1
      %s447 = scalar_select %p446, %s26, 1
      %s448 = smul.addr %s447, 4
      %s449 = scalar_lea.vmem %s2, %s448
      %p450 = pneg %p89
      %p451 = pneg %p86
      %p452 = pneg %p110
      %p453 = pneg %p107
      %p454 = pneg %p131
      %p455 = pneg %p128
      %p456 = pneg %p152
      %p457 = pneg %p149
      %p458 = pneg %p173
      %p459 = pneg %p170
      %p460 = pneg %p194
      %p461 = pneg %p191
      %p462 = pneg %p215
      %p463 = pneg %p212
      %p464 = pneg %p236
      %p465 = pneg %p233
      %p466 = pneg %p257
      %p467 = pneg %p254
      %p468 = pneg %p278
      %p469 = pneg %p275
      %p470 = pneg %p299
      %p471 = pneg %p296
      %p472 = pneg %p320
      %p473 = pneg %p317
      %p474 = pneg %p341
      %p475 = pneg %p338
      %p476 = pneg %p367
      %p477 = pneg %p364
      %p478 = scmp.lt.s32.totalorder %s26, 1
      %s479 = scalar_select %p478, %s26, 1
      %s480 = smul.addr %s479, 8
      %s481 = scalar_lea.vmem %s15, %s480
      %p482 = scmp.lt.s32.totalorder %s26, 1
      %s483 = scalar_select %p482, %s26, 1
      %s484 = smul.addr %s483, 4
      %s485 = scalar_lea.vmem %s2, %s484
      %p486 = scmp.lt.s32.totalorder %s26, 1
      %s487 = scalar_select %p486, %s26, 1
      %s488 = smul.addr %s487, 8
      %s489 = scalar_lea.vmem %s15, %s488
      %v490 = vld [vmem:[%s0] sm:$0xff]
      %v491 = vld [vmem:[%s0 + $0x8] sm:$0xff]
      %v492 = vld [vmem:[%s0 + $0x10] sm:$0xff]
      %v493 = vld [vmem:[%s0 + $0x18] sm:$0xff]
      %v494 = vld [vmem:[%s0 + $0x20] sm:$0xf]
      %v495 = vld [vmem:[%s1] sm:$0xff]
      %v496 = vld [vmem:[%s1 + $0x8] sm:$0xff]
      %v497 = vld [vmem:[%s1 + $0x10] sm:$0xff]
      %v498 = vld [vmem:[%s1 + $0x18] sm:$0xff]
      %v499 = vld [vmem:[%s1 + $0x20] sm:$0xff]
      %v500 = vld [vmem:[%s1 + $0x28] sm:$0xff]
      %v501 = vld [vmem:[%s1 + $0x30] sm:$0xff]
      %v502 = vld [vmem:[%s1 + $0x38] sm:$0xff]
      %v503 = vld [vmem:[%s1 + $0x40] sm:$0xff]
      %v504 = vld [vmem:[%s485] sm:$0xf]
      %v505 = vld [vmem:[%s3] sm:$0xf]
      %vm506 = vcmask 1048064
      %507 = vrot.lane.b32.xlu0 %v504, 64
      %v508 = vpop.permute.xlu0 %507
      %v509 = vsel %vm506, %v508, %v504
      %510 = vrot.lane.b32.xlu0 %v509, 64
      %v511 = vpop.permute.xlu0 %510
      %v512 = vsel %vm506, %v511, %v504
      %v514 = vrot.slane %v512, 4
      %515 = vrot.lane.b32.xlu0 %v514, 127
      %v516 = vpop.permute.xlu0 %515
      %518 = vrot.lane.b32.xlu0 %v512, 126
      %v519 = vpop.permute.xlu0 %518
      %521 = vrot.lane.b32.xlu0 %v514, 120
      %v522 = vpop.permute.xlu0 %521
      %525 = vrot.lane.b32.xlu0 %v504, 55
      %v526 = vpop.permute.xlu0 %525
      %528 = vrot.lane.b32.xlu0 %v514, 54
      %v529 = vpop.permute.xlu0 %528
      %531 = vrot.lane.b32.xlu0 %v512, 48
      %v532 = vpop.permute.xlu0 %531
      %534 = vrot.lane.b32.xlu0 %v514, 47
      %v535 = vpop.permute.xlu0 %534
      %537 = vrot.lane.b32.xlu0 %v512, 46
      %v538 = vpop.permute.xlu0 %537
      %vm540 = vcmask 1043456
      %v541 = vsel %vm540, %v512, %v516
      %v542 = vsel %vm540, %v519, %v522
      %v543 = vsel %vm540, %v526, %v529
      %v544 = vsel %vm540, %v532, %v535
      %550 = vrot.lane.b32.xlu0 %v490, 55
      %v551 = vpop.permute.xlu0 %550
      %552 = vrot.lane.b32.xlu0 %v491, 55
      %v553 = vpop.permute.xlu0 %552
      %554 = vrot.lane.b32.xlu0 %v492, 55
      %v555 = vpop.permute.xlu0 %554
      %556 = vrot.lane.b32.xlu0 %v493, 55
      %v557 = vpop.permute.xlu0 %556
      %558 = vrot.lane.b32.xlu0 %v494, 55
      %v559 = vpop.permute.xlu0 %558
      %v565 = vmul.f32 %v541, %v551
      %v566 = vmul.f32 %v542, %v553
      %v567 = vmul.f32 %v543, %v555
      %v568 = vmul.f32 %v544, %v557
      %v569 = vmul.f32 %v538, %v559
      %575 = vrot.lane.b32.xlu0 %v565, 73
      %v576 = vpop.permute.xlu0 %575
      %577 = vrot.lane.b32.xlu0 %v566, 73
      %v578 = vpop.permute.xlu0 %577
      %579 = vrot.lane.b32.xlu0 %v567, 73
      %v580 = vpop.permute.xlu0 %579
      %581 = vrot.lane.b32.xlu0 %v568, 73
      %v582 = vpop.permute.xlu0 %581
      %583 = vrot.lane.b32.xlu0 %v569, 73
      %v584 = vpop.permute.xlu0 %583
      %vm589 = vcmask 293888
      %v591 = vsel %vm589, %v505, 0
      %v593 = vsel %vm540, %v584, 0
      %595 = vmatprep.subr.mxu0 0.0
      %596 = vmatpush1.msra.mxu0 %v576
      %597 = vmatprep.subr.mxu0 0.0
      %598 = vmatpush1.msra.mxu0 %v578
      %599 = vmatprep.subr.mxu0 0.0
      %600 = vmatpush1.msra.mxu0 %v580
      %601 = vmatprep.subr.mxu0 0.0
      %602 = vmatpush1.msra.mxu0 %v582
      %603 = vmatprep.subr.mxu0 0.0
      %604 = vmatpush1.msra.mxu0 %v593
      %605 = vmatprep.subr.mxu0 0.0
      %606 = vmatpush1.msra.mxu0 0.0
      %607 = vmatprep.subr.mxu0 0.0
      %608 = vmatpush1.msra.mxu0 0.0
      %609 = vmatprep.subr.mxu0 0.0
      %610 = vmatpush1.msra.mxu0 0.0
      %611 = vmatprep.subr.mxu0 0.0
      %612 = vmatpush1.msra.mxu0 0.0
      %613 = vmatprep.subr.mxu0 0.0
      %614 = vmatpush1.msra.mxu0 0.0
      %615 = vmatprep.subr.mxu0 0.0
      %616 = vmatpush1.msra.mxu0 0.0
      %617 = vmatprep.subr.mxu0 0.0
      %618 = vmatpush1.msra.mxu0 0.0
      %619 = vmatprep.subr.mxu0 0.0
      %620 = vmatpush1.msra.mxu0 0.0
      %621 = vmatprep.subr.mxu0 0.0
      %622 = vmatpush1.msra.mxu0 0.0
      %623 = vmatprep.subr.mxu0 0.0
      %624 = vmatpush1.msra.mxu0 0.0
      %625 = vmatprep.subr.mxu0 0.0
      %626 = vmatpush1.msra.mxu0 0.0
      %627 = vmatprep.subr.mxu0 0.0
      %628 = vmatpush1.msra.mxu0 0.0
      %629 = vmatprep.subr.mxu0 0.0
      %630 = vmatpush1.msra.mxu0 0.0
      %631 = vmatprep.subr.mxu0 0.0
      %632 = vmatpush1.msra.mxu0 0.0
      %633 = vmatprep.subr.mxu0 0.0
      %634 = vmatpush1.msra.mxu0 0.0
      %635 = vmatprep.subr.mxu0 0.0
      %636 = vmatpush1.msra.mxu0 0.0
      %637 = vmatprep.subr.mxu0 0.0
      %638 = vmatpush1.msra.mxu0 0.0
      %639 = vmatprep.subr.mxu0 0.0
      %640 = vmatpush1.msra.mxu0 0.0
      %641 = vmatprep.subr.mxu0 0.0
      %642 = vmatpush1.msra.mxu0 0.0
      %643 = vmatprep.subr.mxu0 0.0
      %644 = vmatpush1.msra.mxu0 0.0
      %645 = vmatprep.subr.mxu0 0.0
      %646 = vmatpush1.msra.mxu0 0.0
      %647 = vmatprep.subr.mxu0 0.0
      %648 = vmatpush1.msra.mxu0 0.0
      %649 = vmatprep.subr.mxu0 0.0
      %650 = vmatpush1.msra.mxu0 0.0
      %651 = vmatprep.subr.mxu0 0.0
      %652 = vmatpush1.msra.mxu0 0.0
      %653 = vmatprep.subr.mxu0 0.0
      %654 = vmatpush1.msra.mxu0 0.0
      %655 = vmatprep.subr.mxu0 0.0
      %656 = vmatpush1.msra.mxu0 0.0
      %657 = vmatprep.subr.mxu0 0.0
      %658 = vmatpush1.msra.mxu0 0.0
      %659 = vmatprep.mubr.f32.mxu0 0.0
      %660 = vmatmul.mubr.f32.gmra.mrb[0].mxu0 %v591
      %v661 = vpop.f32.mrb[0].mxu0
      %v662 = vadd.f32 0.0, %v661
      %v663 = vpop.f32.mrb[0].mxu0
      %664 = vdwg.mxu0
      %vm665 = vcmask 519168
      %v666 = vsel %vm665, %v662, 0.0
      %667 = vadd.xlane.f32.xlu0 %v666
      %v668 = vpop.xlane.xlu0 %667
      %v669 = vrot.slane %v668, 4
      %v670 = vadd.f32 %v668, %v669
      %v671 = vrot.slane %v670, 2
      %v672 = vadd.f32 %v670, %v671
      %v673 = vrot.slane %v672, 1
      %v674 = vadd.f32 %v672, %v673
      %s675 = vtos %v674
      %v676 = vstv %s675
      %v677 = vmul.f32 %v676, 0.00390625
      %v678 = vmul.f32 %v662, %v662
      %v679 = vsel %vm665, %v678, 0.0
      %680 = vadd.xlane.f32.xlu0 %v679
      %v681 = vpop.xlane.xlu0 %680
      %v682 = vrot.slane %v681, 4
      %v683 = vadd.f32 %v681, %v682
      %v684 = vrot.slane %v683, 2
      %v685 = vadd.f32 %v683, %v684
      %v686 = vrot.slane %v685, 1
      %v687 = vadd.f32 %v685, %v686
      %s688 = vtos %v687
      %v689 = vstv %s688
      %v690 = vmul.f32 %v689, 0.00390625
      %v691 = vmul.f32 %v677, %v677
      %v692 = vsub.f32 %v690, %v691
      %v693 = vmax.f32 %v692, 0.0
      %v694 = vsub.f32 %v662, %v677
      %v695 = vadd.f32 %v693, 1e-05
      %v696 = vrsqrt.pop %v695
      %v697 = vmul.f32 %v694, %v696
      %v698 = vld [vmem:[%s4] sm:$0xf]
      %700 = vset.pattern.permute.xlu0 0
      %701 = vperm.xlu0 %700, %v698
      %v702 = vpop.permute.xlu0 %701
      %v704 = vmul.f32 %v697, %v702
      %v705 = vld [vmem:[%s5] sm:$0xf]
      %707 = vset.pattern.permute.xlu0 0
      %708 = vperm.xlu0 %707, %v705
      %v709 = vpop.permute.xlu0 %708
      %v711 = vadd.f32 %v704, %v709
      %v712 = vmul.f32 %v711, 0.5
      %v713 = vmul.f32 %v711, 0.70710677
      %vm714 = vcmp.ge.f32.partialorder %v713, 0.0
      %v715 = vsel %vm714, 1.0, -1.0
      %v716 = vand.u32 2147483647, %v713
      %v717 = vmul.f32 %v716, 0.3275911
      %v718 = vadd.f32 %v717, 1.0
      %v719 = vrcp.pop %v718
      %v720 = vmul.f32 %v718, %v719
      %v721 = vsub.f32 2.0, %v720
      %v722 = vmul.f32 %v719, %v721
      %v723 = vmul.f32 %v722, 1.0614054
      %v724 = vadd.f32 %v723, -1.4531521
      %v725 = vmul.f32 %v724, %v722
      %v726 = vadd.f32 %v725, 1.4214138
      %v727 = vmul.f32 %v726, %v722
      %v728 = vadd.f32 %v727, -0.28449672
      %v729 = vmul.f32 %v728, %v722
      %v730 = vadd.f32 %v729, 0.2548296
      %v731 = vmul.f32 %v730, %v722
      %v732 = vsub.f32 0.0, %v716
      %v733 = vmul.f32 %v732, %v716
      %v734 = vmul.f32 %v733, 1.442695
      %v735 = vpow.pop %v734
      %v736 = vmul.f32 %v731, %v735
      %v737 = vsub.f32 1.0, %v736
      %v738 = vmul.f32 %v715, %v737
      %v739 = vadd.f32 %v738, 1.0
      %v740 = vmul.f32 %v712, %v739
      %v741 = vld [vmem:[%s6] sm:$0xf]
      %742 = vrot.lane.b32.xlu0 %v740, 64
      %v743 = vpop.permute.xlu0 %742
      %v744 = vsel %vm506, %v743, %v740
      %745 = vrot.lane.b32.xlu0 %v744, 64
      %v746 = vpop.permute.xlu0 %745
      %v747 = vsel %vm506, %v746, %v740
      %v749 = vrot.slane %v747, 4
      %750 = vrot.lane.b32.xlu0 %v749, 127
      %v751 = vpop.permute.xlu0 %750
      %753 = vrot.lane.b32.xlu0 %v747, 126
      %v754 = vpop.permute.xlu0 %753
      %756 = vrot.lane.b32.xlu0 %v749, 120
      %v757 = vpop.permute.xlu0 %756
      %760 = vrot.lane.b32.xlu0 %v740, 55
      %v761 = vpop.permute.xlu0 %760
      %763 = vrot.lane.b32.xlu0 %v749, 54
      %v764 = vpop.permute.xlu0 %763
      %766 = vrot.lane.b32.xlu0 %v747, 48
      %v767 = vpop.permute.xlu0 %766
      %769 = vrot.lane.b32.xlu0 %v749, 47
      %v770 = vpop.permute.xlu0 %769
      %772 = vrot.lane.b32.xlu0 %v747, 46
      %v773 = vpop.permute.xlu0 %772
      %v775 = vsel %vm540, %v747, %v751
      %v776 = vsel %vm540, %v754, %v757
      %v777 = vsel %vm540, %v761, %v764
      %v778 = vsel %vm540, %v767, %v770
      %v779 = vmul.f32 %v775, %v551
      %v780 = vmul.f32 %v776, %v553
      %v781 = vmul.f32 %v777, %v555
      %v782 = vmul.f32 %v778, %v557
      %v783 = vmul.f32 %v773, %v559
      %789 = vrot.lane.b32.xlu0 %v779, 73
      %v790 = vpop.permute.xlu0 %789
      %791 = vrot.lane.b32.xlu0 %v780, 73
      %v792 = vpop.permute.xlu0 %791
      %793 = vrot.lane.b32.xlu0 %v781, 73
      %v794 = vpop.permute.xlu0 %793
      %795 = vrot.lane.b32.xlu0 %v782, 73
      %v796 = vpop.permute.xlu0 %795
      %797 = vrot.lane.b32.xlu0 %v783, 73
      %v798 = vpop.permute.xlu0 %797
      %v804 = vsel %vm589, %v741, 0
      %v806 = vsel %vm540, %v798, 0
      %808 = vmatprep.subr.mxu0 0.0
      %809 = vmatpush1.msra.mxu0 %v790
      %810 = vmatprep.subr.mxu0 0.0
      %811 = vmatpush1.msra.mxu0 %v792
      %812 = vmatprep.subr.mxu0 0.0
      %813 = vmatpush1.msra.mxu0 %v794
      %814 = vmatprep.subr.mxu0 0.0
      %815 = vmatpush1.msra.mxu0 %v796
      %816 = vmatprep.subr.mxu0 0.0
      %817 = vmatpush1.msra.mxu0 %v806
      %818 = vmatprep.subr.mxu0 0.0
      %819 = vmatpush1.msra.mxu0 0.0
      %820 = vmatprep.subr.mxu0 0.0
      %821 = vmatpush1.msra.mxu0 0.0
      %822 = vmatprep.subr.mxu0 0.0
      %823 = vmatpush1.msra.mxu0 0.0
      %824 = vmatprep.subr.mxu0 0.0
      %825 = vmatpush1.msra.mxu0 0.0
      %826 = vmatprep.subr.mxu0 0.0
      %827 = vmatpush1.msra.mxu0 0.0
      %828 = vmatprep.subr.mxu0 0.0
      %829 = vmatpush1.msra.mxu0 0.0
      %830 = vmatprep.subr.mxu0 0.0
      %831 = vmatpush1.msra.mxu0 0.0
      %832 = vmatprep.subr.mxu0 0.0
      %833 = vmatpush1.msra.mxu0 0.0
      %834 = vmatprep.subr.mxu0 0.0
      %835 = vmatpush1.msra.mxu0 0.0
      %836 = vmatprep.subr.mxu0 0.0
      %837 = vmatpush1.msra.mxu0 0.0
      %838 = vmatprep.subr.mxu0 0.0
      %839 = vmatpush1.msra.mxu0 0.0
      %840 = vmatprep.subr.mxu0 0.0
      %841 = vmatpush1.msra.mxu0 0.0
      %842 = vmatprep.subr.mxu0 0.0
      %843 = vmatpush1.msra.mxu0 0.0
      %844 = vmatprep.subr.mxu0 0.0
      %845 = vmatpush1.msra.mxu0 0.0
      %846 = vmatprep.subr.mxu0 0.0
      %847 = vmatpush1.msra.mxu0 0.0
      %848 = vmatprep.subr.mxu0 0.0
      %849 = vmatpush1.msra.mxu0 0.0
      %850 = vmatprep.subr.mxu0 0.0
      %851 = vmatpush1.msra.mxu0 0.0
      %852 = vmatprep.subr.mxu0 0.0
      %853 = vmatpush1.msra.mxu0 0.0
      %854 = vmatprep.subr.mxu0 0.0
      %855 = vmatpush1.msra.mxu0 0.0
      %856 = vmatprep.subr.mxu0 0.0
      %857 = vmatpush1.msra.mxu0 0.0
      %858 = vmatprep.subr.mxu0 0.0
      %859 = vmatpush1.msra.mxu0 0.0
      %860 = vmatprep.subr.mxu0 0.0
      %861 = vmatpush1.msra.mxu0 0.0
      %862 = vmatprep.subr.mxu0 0.0
      %863 = vmatpush1.msra.mxu0 0.0
      %864 = vmatprep.subr.mxu0 0.0
      %865 = vmatpush1.msra.mxu0 0.0
      %866 = vmatprep.subr.mxu0 0.0
      %867 = vmatpush1.msra.mxu0 0.0
      %868 = vmatprep.subr.mxu0 0.0
      %869 = vmatpush1.msra.mxu0 0.0
      %870 = vmatprep.subr.mxu0 0.0
      %871 = vmatpush1.msra.mxu0 0.0
      %872 = vmatprep.mubr.f32.mxu0 0.0
      %873 = vmatmul.mubr.f32.gmra.mrb[0].mxu0 %v804
      %v874 = vpop.f32.mrb[0].mxu0
      %v875 = vadd.f32 0.0, %v874
      %v876 = vpop.f32.mrb[0].mxu0
      %877 = vdwg.mxu0
      %v878 = vsel %vm665, %v875, 0.0
      %879 = vadd.xlane.f32.xlu0 %v878
      %v880 = vpop.xlane.xlu0 %879
      %v881 = vrot.slane %v880, 4
      %v882 = vadd.f32 %v880, %v881
      %v883 = vrot.slane %v882, 2
      %v884 = vadd.f32 %v882, %v883
      %v885 = vrot.slane %v884, 1
      %v886 = vadd.f32 %v884, %v885
      %s887 = vtos %v886
      %v888 = vstv %s887
      %v889 = vmul.f32 %v888, 0.00390625
      %v890 = vmul.f32 %v875, %v875
      %v891 = vsel %vm665, %v890, 0.0
      %892 = vadd.xlane.f32.xlu0 %v891
      %v893 = vpop.xlane.xlu0 %892
      %v894 = vrot.slane %v893, 4
      %v895 = vadd.f32 %v893, %v894
      %v896 = vrot.slane %v895, 2
      %v897 = vadd.f32 %v895, %v896
      %v898 = vrot.slane %v897, 1
      %v899 = vadd.f32 %v897, %v898
      %s900 = vtos %v899
      %v901 = vstv %s900
      %v902 = vmul.f32 %v901, 0.00390625
      %v903 = vmul.f32 %v889, %v889
      %v904 = vsub.f32 %v902, %v903
      %v905 = vmax.f32 %v904, 0.0
      %v906 = vsub.f32 %v875, %v889
      %v907 = vadd.f32 %v905, 1e-05
      %v908 = vrsqrt.pop %v907
      %v909 = vmul.f32 %v906, %v908
      %v910 = vld [vmem:[%s7] sm:$0xf]
      %912 = vset.pattern.permute.xlu0 0
      %913 = vperm.xlu0 %912, %v910
      %v914 = vpop.permute.xlu0 %913
      %v916 = vmul.f32 %v909, %v914
      %v917 = vld [vmem:[%s8] sm:$0xf]
      %919 = vset.pattern.permute.xlu0 0
      %920 = vperm.xlu0 %919, %v917
      %v921 = vpop.permute.xlu0 %920
      %v923 = vadd.f32 %v916, %v921
      %v924 = vadd.f32 %v504, %v923
      %v925 = vmul.f32 %v924, 0.5
      %v926 = vmul.f32 %v924, 0.70710677
      %vm927 = vcmp.ge.f32.partialorder %v926, 0.0
      %v928 = vsel %vm927, 1.0, -1.0
      %v929 = vand.u32 2147483647, %v926
      %v930 = vmul.f32 %v929, 0.3275911
      %v931 = vadd.f32 %v930, 1.0
      %v932 = vrcp.pop %v931
      %v933 = vmul.f32 %v931, %v932
      %v934 = vsub.f32 2.0, %v933
      %v935 = vmul.f32 %v932, %v934
      %v936 = vmul.f32 %v935, 1.0614054
      %v937 = vadd.f32 %v936, -1.4531521
      %v938 = vmul.f32 %v937, %v935
      %v939 = vadd.f32 %v938, 1.4214138
      %v940 = vmul.f32 %v939, %v935
      %v941 = vadd.f32 %v940, -0.28449672
      %v942 = vmul.f32 %v941, %v935
      %v943 = vadd.f32 %v942, 0.2548296
      %v944 = vmul.f32 %v943, %v935
      %v945 = vsub.f32 0.0, %v929
      %v946 = vmul.f32 %v945, %v929
      %v947 = vmul.f32 %v946, 1.442695
      %v948 = vpow.pop %v947
      %v949 = vmul.f32 %v944, %v948
      %v950 = vsub.f32 1.0, %v949
      %v951 = vmul.f32 %v928, %v950
      %v952 = vadd.f32 %v951, 1.0
      %v953 = vmul.f32 %v925, %v952
      %v954 = vld [vmem:[%s9] sm:$0xff]
      %955 = vrot.lane.b32.xlu0 %v953, 64
      %v956 = vpop.permute.xlu0 %955
      %v957 = vsel %vm506, %v956, %v953
      %958 = vrot.lane.b32.xlu0 %v957, 64
      %v959 = vpop.permute.xlu0 %958
      %v960 = vsel %vm506, %v959, %v953
      %v962 = vrot.slane %v960, 4
      %963 = vrot.lane.b32.xlu0 %v962, 127
      %v964 = vpop.permute.xlu0 %963
      %966 = vrot.lane.b32.xlu0 %v960, 126
      %v967 = vpop.permute.xlu0 %966
      %969 = vrot.lane.b32.xlu0 %v962, 120
      %v970 = vpop.permute.xlu0 %969
      %973 = vrot.lane.b32.xlu0 %v953, 55
      %v974 = vpop.permute.xlu0 %973
      %976 = vrot.lane.b32.xlu0 %v962, 54
      %v977 = vpop.permute.xlu0 %976
      %979 = vrot.lane.b32.xlu0 %v960, 48
      %v980 = vpop.permute.xlu0 %979
      %982 = vrot.lane.b32.xlu0 %v962, 47
      %v983 = vpop.permute.xlu0 %982
      %985 = vrot.lane.b32.xlu0 %v960, 46
      %v986 = vpop.permute.xlu0 %985
      %v988 = vsel %vm540, %v960, %v964
      %v989 = vsel %vm540, %v967, %v970
      %v990 = vsel %vm540, %v974, %v977
      %v991 = vsel %vm540, %v980, %v983
      %v992 = vmul.f32 %v988, %v551
      %v993 = vmul.f32 %v989, %v553
      %v994 = vmul.f32 %v990, %v555
      %v995 = vmul.f32 %v991, %v557
      %v996 = vmul.f32 %v986, %v559
      %1002 = vrot.lane.b32.xlu0 %v992, 73
      %v1003 = vpop.permute.xlu0 %1002
      %1004 = vrot.lane.b32.xlu0 %v993, 73
      %v1005 = vpop.permute.xlu0 %1004
      %1006 = vrot.lane.b32.xlu0 %v994, 73
      %v1007 = vpop.permute.xlu0 %1006
      %1008 = vrot.lane.b32.xlu0 %v995, 73
      %v1009 = vpop.permute.xlu0 %1008
      %1010 = vrot.lane.b32.xlu0 %v996, 73
      %v1011 = vpop.permute.xlu0 %1010
      %v1017 = vsel %vm589, %v954, 0
      %v1019 = vsel %vm540, %v1011, 0
      %1021 = vmatprep.subr.mxu0 0.0
      %1022 = vmatpush1.msra.mxu0 %v1003
      %1023 = vmatprep.subr.mxu0 0.0
      %1024 = vmatpush1.msra.mxu0 %v1005
      %1025 = vmatprep.subr.mxu0 0.0
      %1026 = vmatpush1.msra.mxu0 %v1007
      %1027 = vmatprep.subr.mxu0 0.0
      %1028 = vmatpush1.msra.mxu0 %v1009
      %1029 = vmatprep.subr.mxu0 0.0
      %1030 = vmatpush1.msra.mxu0 %v1019
      %1031 = vmatprep.subr.mxu0 0.0
      %1032 = vmatpush1.msra.mxu0 0.0
      %1033 = vmatprep.subr.mxu0 0.0
      %1034 = vmatpush1.msra.mxu0 0.0
      %1035 = vmatprep.subr.mxu0 0.0
      %1036 = vmatpush1.msra.mxu0 0.0
      %1037 = vmatprep.subr.mxu0 0.0
      %1038 = vmatpush1.msra.mxu0 0.0
      %1039 = vmatprep.subr.mxu0 0.0
      %1040 = vmatpush1.msra.mxu0 0.0
      %1041 = vmatprep.subr.mxu0 0.0
      %1042 = vmatpush1.msra.mxu0 0.0
      %1043 = vmatprep.subr.mxu0 0.0
      %1044 = vmatpush1.msra.mxu0 0.0
      %1045 = vmatprep.subr.mxu0 0.0
      %1046 = vmatpush1.msra.mxu0 0.0
      %1047 = vmatprep.subr.mxu0 0.0
      %1048 = vmatpush1.msra.mxu0 0.0
      %1049 = vmatprep.subr.mxu0 0.0
      %1050 = vmatpush1.msra.mxu0 0.0
      %1051 = vmatprep.subr.mxu0 0.0
      %1052 = vmatpush1.msra.mxu0 0.0
      %1053 = vmatprep.subr.mxu0 0.0
      %1054 = vmatpush1.msra.mxu0 0.0
      %1055 = vmatprep.subr.mxu0 0.0
      %1056 = vmatpush1.msra.mxu0 0.0
      %1057 = vmatprep.subr.mxu0 0.0
      %1058 = vmatpush1.msra.mxu0 0.0
      %1059 = vmatprep.subr.mxu0 0.0
      %1060 = vmatpush1.msra.mxu0 0.0
      %1061 = vmatprep.subr.mxu0 0.0
      %1062 = vmatpush1.msra.mxu0 0.0
      %1063 = vmatprep.subr.mxu0 0.0
      %1064 = vmatpush1.msra.mxu0 0.0
      %1065 = vmatprep.subr.mxu0 0.0
      %1066 = vmatpush1.msra.mxu0 0.0
      %1067 = vmatprep.subr.mxu0 0.0
      %1068 = vmatpush1.msra.mxu0 0.0
      %1069 = vmatprep.subr.mxu0 0.0
      %1070 = vmatpush1.msra.mxu0 0.0
      %1071 = vmatprep.subr.mxu0 0.0
      %1072 = vmatpush1.msra.mxu0 0.0
      %1073 = vmatprep.subr.mxu0 0.0
      %1074 = vmatpush1.msra.mxu0 0.0
      %1075 = vmatprep.subr.mxu0 0.0
      %1076 = vmatpush1.msra.mxu0 0.0
      %1077 = vmatprep.subr.mxu0 0.0
      %1078 = vmatpush1.msra.mxu0 0.0
      %1079 = vmatprep.subr.mxu0 0.0
      %1080 = vmatpush1.msra.mxu0 0.0
      %1081 = vmatprep.subr.mxu0 0.0
      %1082 = vmatpush1.msra.mxu0 0.0
      %1083 = vmatprep.subr.mxu0 0.0
      %1084 = vmatpush1.msra.mxu0 0.0
      %1085 = vmatprep.mubr.f32.mxu0 0.0
      %1086 = vmatmul.mubr.f32.gmra.mrb[0].mxu0 %v1017
      %v1087 = vpop.f32.mrb[0].mxu0
      %v1088 = vadd.f32 0.0, %v1087
      %v1089 = vpop.f32.mrb[0].mxu0
      %1090 = vdwg.mxu0
      %vm1091 = vcmask 523264
      %v1092 = vsel %vm1091, %v1088, 0.0
      %1093 = vadd.xlane.f32.xlu0 %v1092
      %v1094 = vpop.xlane.xlu0 %1093
      %v1095 = vrot.slane %v1094, 4
      %v1096 = vadd.f32 %v1094, %v1095
      %v1097 = vrot.slane %v1096, 2
      %v1098 = vadd.f32 %v1096, %v1097
      %v1099 = vrot.slane %v1098, 1
      %v1100 = vadd.f32 %v1098, %v1099
      %s1101 = vtos %v1100
      %v1102 = vstv %s1101
      %v1103 = vmul.f32 %v1102, 0.001953125
      %v1104 = vmul.f32 %v1088, %v1088
      %v1105 = vsel %vm1091, %v1104, 0.0
      %1106 = vadd.xlane.f32.xlu0 %v1105
      %v1107 = vpop.xlane.xlu0 %1106
      %v1108 = vrot.slane %v1107, 4
      %v1109 = vadd.f32 %v1107, %v1108
      %v1110 = vrot.slane %v1109, 2
      %v1111 = vadd.f32 %v1109, %v1110
      %v1112 = vrot.slane %v1111, 1
      %v1113 = vadd.f32 %v1111, %v1112
      %s1114 = vtos %v1113
      %v1115 = vstv %s1114
      %v1116 = vmul.f32 %v1115, 0.001953125
      %v1117 = vmul.f32 %v1103, %v1103
      %v1118 = vsub.f32 %v1116, %v1117
      %v1119 = vmax.f32 %v1118, 0.0
      %v1120 = vsub.f32 %v1088, %v1103
      %v1121 = vadd.f32 %v1119, 1e-05
      %v1122 = vrsqrt.pop %v1121
      %v1123 = vmul.f32 %v1120, %v1122
      %v1124 = vld [vmem:[%s10] sm:$0xff]
      %1126 = vset.pattern.permute.xlu0 0
      %1127 = vperm.xlu0 %1126, %v1124
      %v1128 = vpop.permute.xlu0 %1127
      %v1130 = vmul.f32 %v1123, %v1128
      %v1131 = vld [vmem:[%s11] sm:$0xff]
      %1133 = vset.pattern.permute.xlu0 0
      %1134 = vperm.xlu0 %1133, %v1131
      %v1135 = vpop.permute.xlu0 %1134
      %v1137 = vadd.f32 %v1130, %v1135
      %v1138 = vmul.f32 %v1137, 0.5
      %v1139 = vmul.f32 %v1137, 0.70710677
      %vm1140 = vcmp.ge.f32.partialorder %v1139, 0.0
      %v1141 = vsel %vm1140, 1.0, -1.0
      %v1142 = vand.u32 2147483647, %v1139
      %v1143 = vmul.f32 %v1142, 0.3275911
      %v1144 = vadd.f32 %v1143, 1.0
      %v1145 = vrcp.pop %v1144
      %v1146 = vmul.f32 %v1144, %v1145
      %v1147 = vsub.f32 2.0, %v1146
      %v1148 = vmul.f32 %v1145, %v1147
      %v1149 = vmul.f32 %v1148, 1.0614054
      %v1150 = vadd.f32 %v1149, -1.4531521
      %v1151 = vmul.f32 %v1150, %v1148
      %v1152 = vadd.f32 %v1151, 1.4214138
      %v1153 = vmul.f32 %v1152, %v1148
      %v1154 = vadd.f32 %v1153, -0.28449672
      %v1155 = vmul.f32 %v1154, %v1148
      %v1156 = vadd.f32 %v1155, 0.2548296
      %v1157 = vmul.f32 %v1156, %v1148
      %v1158 = vsub.f32 0.0, %v1142
      %v1159 = vmul.f32 %v1158, %v1142
      %v1160 = vmul.f32 %v1159, 1.442695
      %v1161 = vpow.pop %v1160
      %v1162 = vmul.f32 %v1157, %v1161
      %v1163 = vsub.f32 1.0, %v1162
      %v1164 = vmul.f32 %v1141, %v1163
      %v1165 = vadd.f32 %v1164, 1.0
      %v1166 = vmul.f32 %v1138, %v1165
      %v1167 = vld [vmem:[%s12] sm:$0xff]
      %1168 = vrot.lane.b32.xlu0 %v1166, 64
      %v1169 = vpop.permute.xlu0 %1168
      %v1170 = vsel %vm506, %v1169, %v1166
      %1171 = vrot.lane.b32.xlu0 %v1170, 64
      %v1172 = vpop.permute.xlu0 %1171
      %v1173 = vsel %vm506, %v1172, %v1166
      %1175 = vrot.lane.b32.xlu0 %v1173, 127
      %v1176 = vpop.permute.xlu0 %1175
      %1178 = vrot.lane.b32.xlu0 %v1173, 126
      %v1179 = vpop.permute.xlu0 %1178
      %1181 = vrot.lane.b32.xlu0 %v1173, 120
      %v1182 = vpop.permute.xlu0 %1181
      %1185 = vrot.lane.b32.xlu0 %v1166, 55
      %v1186 = vpop.permute.xlu0 %1185
      %1188 = vrot.lane.b32.xlu0 %v1173, 54
      %v1189 = vpop.permute.xlu0 %1188
      %1191 = vrot.lane.b32.xlu0 %v1173, 48
      %v1192 = vpop.permute.xlu0 %1191
      %1194 = vrot.lane.b32.xlu0 %v1173, 47
      %v1195 = vpop.permute.xlu0 %1194
      %1197 = vrot.lane.b32.xlu0 %v1173, 46
      %v1198 = vpop.permute.xlu0 %1197
      %1209 = vrot.lane.b32.xlu0 %v495, 55
      %v1210 = vpop.permute.xlu0 %1209
      %1211 = vrot.lane.b32.xlu0 %v496, 55
      %v1212 = vpop.permute.xlu0 %1211
      %1213 = vrot.lane.b32.xlu0 %v497, 55
      %v1214 = vpop.permute.xlu0 %1213
      %1215 = vrot.lane.b32.xlu0 %v498, 55
      %v1216 = vpop.permute.xlu0 %1215
      %1217 = vrot.lane.b32.xlu0 %v499, 55
      %v1218 = vpop.permute.xlu0 %1217
      %1219 = vrot.lane.b32.xlu0 %v500, 55
      %v1220 = vpop.permute.xlu0 %1219
      %1221 = vrot.lane.b32.xlu0 %v501, 55
      %v1222 = vpop.permute.xlu0 %1221
      %1223 = vrot.lane.b32.xlu0 %v502, 55
      %v1224 = vpop.permute.xlu0 %1223
      %1225 = vrot.lane.b32.xlu0 %v503, 55
      %v1226 = vpop.permute.xlu0 %1225
      %v1236 = vmul.f32 %v1173, %v1210
      %v1237 = vmul.f32 %v1176, %v1212
      %v1238 = vmul.f32 %v1179, %v1214
      %v1239 = vmul.f32 %v1182, %v1216
      %v1240 = vmul.f32 %v1186, %v1218
      %v1241 = vmul.f32 %v1189, %v1220
      %v1242 = vmul.f32 %v1192, %v1222
      %v1243 = vmul.f32 %v1195, %v1224
      %v1244 = vmul.f32 %v1198, %v1226
      %1254 = vrot.lane.b32.xlu0 %v1236, 73
      %v1255 = vpop.permute.xlu0 %1254
      %1256 = vrot.lane.b32.xlu0 %v1237, 73
      %v1257 = vpop.permute.xlu0 %1256
      %1258 = vrot.lane.b32.xlu0 %v1238, 73
      %v1259 = vpop.permute.xlu0 %1258
      %1260 = vrot.lane.b32.xlu0 %v1239, 73
      %v1261 = vpop.permute.xlu0 %1260
      %1262 = vrot.lane.b32.xlu0 %v1240, 73
      %v1263 = vpop.permute.xlu0 %1262
      %1264 = vrot.lane.b32.xlu0 %v1241, 73
      %v1265 = vpop.permute.xlu0 %1264
      %1266 = vrot.lane.b32.xlu0 %v1242, 73
      %v1267 = vpop.permute.xlu0 %1266
      %1268 = vrot.lane.b32.xlu0 %v1243, 73
      %v1269 = vpop.permute.xlu0 %1268
      %1270 = vrot.lane.b32.xlu0 %v1244, 73
      %v1271 = vpop.permute.xlu0 %1270
      %vm1281 = vcmask 588800
      %v1283 = vsel %vm1281, %v1167, 0
      %1285 = vmatprep.subr.mxu0 0.0
      %1286 = vmatpush1.msra.mxu0 %v1255
      %1287 = vmatprep.subr.mxu0 0.0
      %1288 = vmatpush1.msra.mxu0 %v1257
      %1289 = vmatprep.subr.mxu0 0.0
      %1290 = vmatpush1.msra.mxu0 %v1259
      %1291 = vmatprep.subr.mxu0 0.0
      %1292 = vmatpush1.msra.mxu0 %v1261
      %1293 = vmatprep.subr.mxu0 0.0
      %1294 = vmatpush1.msra.mxu0 %v1263
      %1295 = vmatprep.subr.mxu0 0.0
      %1296 = vmatpush1.msra.mxu0 %v1265
      %1297 = vmatprep.subr.mxu0 0.0
      %1298 = vmatpush1.msra.mxu0 %v1267
      %1299 = vmatprep.subr.mxu0 0.0
      %1300 = vmatpush1.msra.mxu0 %v1269
      %1301 = vmatprep.subr.mxu0 0.0
      %1302 = vmatpush1.msra.mxu0 %v1271
      %1303 = vmatprep.subr.mxu0 0.0
      %1304 = vmatpush1.msra.mxu0 0.0
      %1305 = vmatprep.subr.mxu0 0.0
      %1306 = vmatpush1.msra.mxu0 0.0
      %1307 = vmatprep.subr.mxu0 0.0
      %1308 = vmatpush1.msra.mxu0 0.0
      %1309 = vmatprep.subr.mxu0 0.0
      %1310 = vmatpush1.msra.mxu0 0.0
      %1311 = vmatprep.subr.mxu0 0.0
      %1312 = vmatpush1.msra.mxu0 0.0
      %1313 = vmatprep.subr.mxu0 0.0
      %1314 = vmatpush1.msra.mxu0 0.0
      %1315 = vmatprep.subr.mxu0 0.0
      %1316 = vmatpush1.msra.mxu0 0.0
      %1317 = vmatprep.subr.mxu0 0.0
      %1318 = vmatpush1.msra.mxu0 0.0
      %1319 = vmatprep.subr.mxu0 0.0
      %1320 = vmatpush1.msra.mxu0 0.0
      %1321 = vmatprep.subr.mxu0 0.0
      %1322 = vmatpush1.msra.mxu0 0.0
      %1323 = vmatprep.subr.mxu0 0.0
      %1324 = vmatpush1.msra.mxu0 0.0
      %1325 = vmatprep.subr.mxu0 0.0
      %1326 = vmatpush1.msra.mxu0 0.0
      %1327 = vmatprep.subr.mxu0 0.0
      %1328 = vmatpush1.msra.mxu0 0.0
      %1329 = vmatprep.subr.mxu0 0.0
      %1330 = vmatpush1.msra.mxu0 0.0
      %1331 = vmatprep.subr.mxu0 0.0
      %1332 = vmatpush1.msra.mxu0 0.0
      %1333 = vmatprep.subr.mxu0 0.0
      %1334 = vmatpush1.msra.mxu0 0.0
      %1335 = vmatprep.subr.mxu0 0.0
      %1336 = vmatpush1.msra.mxu0 0.0
      %1337 = vmatprep.subr.mxu0 0.0
      %1338 = vmatpush1.msra.mxu0 0.0
      %1339 = vmatprep.subr.mxu0 0.0
      %1340 = vmatpush1.msra.mxu0 0.0
      %1341 = vmatprep.subr.mxu0 0.0
      %1342 = vmatpush1.msra.mxu0 0.0
      %1343 = vmatprep.subr.mxu0 0.0
      %1344 = vmatpush1.msra.mxu0 0.0
      %1345 = vmatprep.subr.mxu0 0.0
      %1346 = vmatpush1.msra.mxu0 0.0
      %1347 = vmatprep.subr.mxu0 0.0
      %1348 = vmatpush1.msra.mxu0 0.0
      %1349 = vmatprep.mubr.f32.mxu0 0.0
      %1350 = vmatmul.mubr.f32.gmra.mrb[0].mxu0 %v1283
      %v1351 = vpop.f32.mrb[0].mxu0
      %v1352 = vadd.f32 0.0, %v1351
      %v1353 = vpop.f32.mrb[0].mxu0
      %1354 = vdwg.mxu0
      %v1355 = vsel %vm1091, %v1352, 0.0
      %1356 = vadd.xlane.f32.xlu0 %v1355
      %v1357 = vpop.xlane.xlu0 %1356
      %v1358 = vrot.slane %v1357, 4
      %v1359 = vadd.f32 %v1357, %v1358
      %v1360 = vrot.slane %v1359, 2
      %v1361 = vadd.f32 %v1359, %v1360
      %v1362 = vrot.slane %v1361, 1
      %v1363 = vadd.f32 %v1361, %v1362
      %s1364 = vtos %v1363
      %v1365 = vstv %s1364
      %v1366 = vmul.f32 %v1365, 0.001953125
      %v1367 = vmul.f32 %v1352, %v1352
      %v1368 = vsel %vm1091, %v1367, 0.0
      %1369 = vadd.xlane.f32.xlu0 %v1368
      %v1370 = vpop.xlane.xlu0 %1369
      %v1371 = vrot.slane %v1370, 4
      %v1372 = vadd.f32 %v1370, %v1371
      %v1373 = vrot.slane %v1372, 2
      %v1374 = vadd.f32 %v1372, %v1373
      %v1375 = vrot.slane %v1374, 1
      %v1376 = vadd.f32 %v1374, %v1375
      %s1377 = vtos %v1376
      %v1378 = vstv %s1377
      %v1379 = vmul.f32 %v1378, 0.001953125
      %v1380 = vmul.f32 %v1366, %v1366
      %v1381 = vsub.f32 %v1379, %v1380
      %v1382 = vmax.f32 %v1381, 0.0
      %v1383 = vsub.f32 %v1352, %v1366
      %v1384 = vadd.f32 %v1382, 1e-05
      %v1385 = vrsqrt.pop %v1384
      %v1386 = vmul.f32 %v1383, %v1385
      %v1387 = vld [vmem:[%s13] sm:$0xff]
      %1389 = vset.pattern.permute.xlu0 0
      %1390 = vperm.xlu0 %1389, %v1387
      %v1391 = vpop.permute.xlu0 %1390
      %v1393 = vmul.f32 %v1386, %v1391
      %v1394 = vld [vmem:[%s14] sm:$0xff]
      %1396 = vset.pattern.permute.xlu0 0
      %1397 = vperm.xlu0 %1396, %v1394
      %v1398 = vpop.permute.xlu0 %1397
      %v1400 = vadd.f32 %v1393, %v1398
      %1401 = vst.msk [vmem:[%s489] sm:$0xff] %vm1091, %v1400
      %p1402 = scmp.lt.s32.totalorder %s26, 1
      %s1403 = scalar_select %p1402, %s26, 1
      %s1404 = smul.addr %s1403, 8
      %s1405 = scalar_lea.vmem %s15, %s1404
      // Predicated region
      $region81: #{down_img_forward.1} parent=79 // pred_check
        %p1406 = pneg %p364
      $region82: #{down_img_forward.1} parent=79 // pred_check_branch
        %1408 = sbr.rel (%p1406) target = $region84
      $region83: #{down_img_forward.1} parent=79 // pred_region
        _
      $region84: #{down_img_forward.1} parent=79 // pred_fallthru
        _
    $region80: #{down_img_forward.1} parent=5 // pred_fallthru
      _
    %p1409 = scmp.le.s32.totalorder 2, %s21
    // Predicated region
    $region85: #{down_img_forward.1} parent=5 // pred_check
      %p1410 = pneg %p1409
    $region86: #{down_img_forward.1} parent=5 // pred_check_branch
      %1412 = sbr.rel (%p1410) target = $region88
    $region87: #{down_img_forward.1} parent=5 // pred_region
      %s1413 = ssub.s32 %s21, 2
      // Predicated region
      $region89: #{down_img_forward.1} parent=87 // pred_check
        %p1414 = pneg %p370
      $region90: #{down_img_forward.1} parent=87 // pred_check_branch
        %1416 = sbr.rel (%p1414) target = $region92
      $region91: #{down_img_forward.1} parent=87 // pred_region
        %p1417 = scmp.lt.s32.totalorder %s27, 1
        %s1418 = scalar_select %p1417, %s27, 1
        %s1419 = smul.addr %s1418, 8
        %s1420 = scalar_lea.vmem %s15, %s1419
      $region92: #{down_img_forward.1} parent=87 // pred_fallthru
        _
    $region88: #{down_img_forward.1} parent=5 // pred_fallthru
      _
  $region6: #{down_img_forward.1} parent=0 // loop_footer
    %s25 = sadd.s32 1, %s21
  $region7: #{down_img_forward.1} parent=0 // loop_footer_branch
    %20 = sbr.rel target = $region3
  $region8: #{down_img_forward.1} parent=0 // loop_exit
    _

</llo_original>
